<compile_context>
chip_gen: v7x
topology: tpu7x:2x2x1
jax: 0.10.0
libtpu: 0.0.40
codegen_flags: <defaults>
</compile_context>

<pallas_src>
import functools

import jax
import jax.numpy as jnp
from jax.experimental import pallas as pl
from jax.experimental.pallas import tpu as pltpu


# ---------------------------------------------------------------------------
# Kernel: fused equivalent-3x3 conv + bias + SiLU on one (TH, W) row tile.
#   x_ref : (1, TH+2, W+2, C1)   padded input slab (1-row halo each side)
#   w_ref : (9, C1, C2)          equivalent 3x3 taps (BN + 1x1 folded in)
#   b_ref : (1, C2)              equivalent bias
#   o_ref : (1, TH, W, C2)
# ---------------------------------------------------------------------------
def _repconv_kernel(x_ref, w_ref, b_ref, o_ref, *, TH, W, C1, C2):
    acc = jnp.zeros((TH * W, C2), jnp.float32)
    # 9 taps = 9 shifted-window matmuls on the MXU, f32 accumulation.
    for kh in range(3):
        for kw in range(3):
            patch = x_ref[0, kh:kh + TH, kw:kw + W, :].reshape(TH * W, C1)
            acc = acc + jnp.dot(patch, w_ref[kh * 3 + kw, :, :],
                                preferred_element_type=jnp.float32)
    y = acc + b_ref[...]                      # folded bias (BN eval mode)
    y = y * jax.nn.sigmoid(y)                 # SiLU
    o_ref[0, :, :, :] = y.reshape(TH, W, C2).astype(o_ref.dtype)


# ---------------------------------------------------------------------------
# Wrapper
# ---------------------------------------------------------------------------
def rep_conv(x_nchw, params, tile_h=8):
    """RepConv forward (eval mode). x_nchw: (B, C1, H, W) f32 -> (B, C2, H, W)."""
    B, C1, H, W = x_nchw.shape
    w3 = params["w3"]                       # (3, 3, C1, C2)  HWIO, conv1
    w1 = params["w1"]                       # (C1, C2)        conv2 (1x1)
    C2 = w3.shape[-1]

    # --- fold eval-mode BN into weights and merge branches into one 3x3 ----
    w_eq = w3 * params["scale1"][None, None, None, :]           # BN1 -> conv1
    w_eq = w_eq.at[1, 1].add(w1 * params["scale2"][None, :])    # 1x1 -> center tap
    b_eq = (params["bias1"] + params["bias2"]).reshape(1, C2)
    w_taps = w_eq.reshape(9, C1, C2)
    # TODO(synk): if constructed with bn=True (identity-BN branch), fold its
    # per-channel scale into w_eq[1, 1] diagonal and its bias into b_eq.

    # --- NHWC layout (channels on the lane axis), 'same' padding -----------
    x_nhwc = jnp.transpose(x_nchw, (0, 2, 3, 1))                 # (B, H, W, C1)
    xp = jnp.pad(x_nhwc, ((0, 0), (1, 1), (1, 1), (0, 0)))       # pad=1

    # Row tiling: choose TH so that 2 x (input + output) blocks stay well
    # under the VMEM budget (v7x: 64 MiB).  For the small test shape this is
    # trivially satisfied; TH must divide H (fallback: whole image).
    TH = tile_h if (tile_h > 0 and H % tile_h == 0) else H
    nH = H // TH
    # Row slabs with a 1-row halo on each side, duplicated in HBM (2/TH extra
    # bytes) so each grid step is a non-overlapping Blocked window.
    slabs = jnp.stack([xp[:, i * TH:i * TH + TH + 2] for i in range(nH)], axis=1)
    slabs = slabs.reshape(B * nH, TH + 2, W + 2, C1)

    kernel = functools.partial(_repconv_kernel, TH=TH, W=W, C1=C1, C2=C2)
    out_nhwc = pl.pallas_call(
        kernel,
        out_shape=jax.ShapeDtypeStruct((B, H, W, C2), jnp.float32),
        grid=(B, nH),
        in_specs=[
            pl.BlockSpec((1, TH + 2, W + 2, C1),
                         lambda b, i: (b * nH + i, 0, 0, 0)),
            pl.BlockSpec((9, C1, C2), lambda b, i: (0, 0, 0)),
            pl.BlockSpec((1, C2), lambda b, i: (0, 0)),
        ],
        out_specs=pl.BlockSpec((1, TH, W, C2), lambda b, i: (b, i, 0, 0)),
        compiler_params=pltpu.CompilerParams(
            dimension_semantics=("parallel", "parallel")),
    )(slabs, w_taps, b_eq)

    return jnp.transpose(out_nhwc, (0, 3, 1, 2))                 # back to NCHW


# ---------------------------------------------------------------------------
# Pure-JAX reference (same math, via lax.conv) for a correctness check.
# ---------------------------------------------------------------------------
def repconv_reference(x_nchw, params):
    dn = ("NCHW", "HWIO", "NCHW")
    w3, w1 = params["w3"], params["w1"]
    y1 = jax.lax.conv_general_dilated(x_nchw, w3, (1, 1), ((1, 1), (1, 1)),
                                      dimension_numbers=dn,
                                      precision=jax.lax.Precision.HIGHEST)
    y2 = jax.lax.conv_general_dilated(x_nchw, w1[None, None], (1, 1),
                                      ((0, 0), (0, 0)), dimension_numbers=dn,
                                      precision=jax.lax.Precision.HIGHEST)
    s1 = params["scale1"][None, :, None, None]
    b1 = params["bias1"][None, :, None, None]
    s2 = params["scale2"][None, :, None, None]
    b2 = params["bias2"][None, :, None, None]
    y = (y1 * s1 + b1) + (y2 * s2 + b2)
    return y * jax.nn.sigmoid(y)


# ---------------------------------------------------------------------------
# Deterministic parameter construction (synthetic, shapes from __init__)
# ---------------------------------------------------------------------------
def make_params(c1, c2, key):
    k1, k2 = jax.random.split(key)
    eps = 1e-5

    # conv1: torch weight (c2, c1, 3, 3) -> stored HWIO (3, 3, c1, c2)
    w3 = 0.1 * jax.random.normal(k1, (3, 3, c1, c2), jnp.float32)
    # conv2: torch weight (c2, c1, 1, 1) -> stored (c1, c2)
    w1 = 0.1 * jax.random.normal(k2, (c1, c2), jnp.float32)

    # BatchNorm (eval mode): scale = gamma/sqrt(var+eps), bias = beta - mean*scale
    def bn_fold(c, base):
        gamma = 1.0 + 0.10 * jnp.arange(c, dtype=jnp.float32) + base
        beta = 0.05 * jnp.arange(c, dtype=jnp.float32) - base
        mean = 0.01 * jnp.arange(c, dtype=jnp.float32)
        var = 1.0 + 0.02 * jnp.arange(c, dtype=jnp.float32)
        scale = gamma / jnp.sqrt(var + eps)
        bias = beta - mean * scale
        return scale, bias

    scale1, bias1 = bn_fold(c2, 0.00)
    scale2, bias2 = bn_fold(c2, 0.05)
    return dict(w3=w3, w1=w1, scale1=scale1, bias1=bias1,
                scale2=scale2, bias2=bias2)


if __name__ == "__main__":
    B, C1, H, W = 2, 4, 16, 16
    C2 = 8

    key = jax.random.PRNGKey(0)
    kx, kp = jax.random.split(key)
    x = jax.random.normal(kx, (B, C1, H, W), jnp.float32)
    params = make_params(C1, C2, kp)

    out = jax.block_until_ready(rep_conv(x, params))
    assert out.shape == (B, C2, H, W), out.shape
    assert jnp.all(jnp.isfinite(out))

    ref = jax.block_until_ready(repconv_reference(x, params))
    max_err = float(jnp.max(jnp.abs(out - ref)))
    assert max_err < 1e-2, f"max abs error vs reference: {max_err}"

    print("KERNEL_OK")
</pallas_src>

<mosaic_0001>
module attributes {stable_mosaic.version = 11 : i64} {
  func.func @_repconv_kernel(%arg0: i32, %arg1: i32, %arg2: memref<1x10x18x4xf32, #tpu.memory_space<vmem>>, %arg3: memref<9x4x8xf32, #tpu.memory_space<vmem>>, %arg4: memref<1x8xf32, #tpu.memory_space<vmem>>, %arg5: memref<1x8x16x8xf32, #tpu.memory_space<vmem>>) attributes {dimension_semantics = [#tpu.dimension_semantics<parallel>, #tpu.dimension_semantics<parallel>], iteration_bounds = array<i64: 2, 2>, scalar_prefetch = 0 : i64, scratch_operands = 0 : i64, tpu.core_type = #tpu.core_type<tc>, window_params = [{transform_indices = @transform_0, window_bounds = array<i64: 1, 10, 18, 4>}, {pipeline_mode = #tpu.pipeline_mode<synchronous>, transform_indices = @transform_1, window_bounds = array<i64: 9, 4, 8>}, {pipeline_mode = #tpu.pipeline_mode<synchronous>, transform_indices = @transform_2, window_bounds = array<i64: 1, 8>}, {transform_indices = @transform_3, window_bounds = array<i64: 1, 8, 16, 8>}]} {
    %cst = arith.constant 0.000000e+00 : f32
    %0 = vector.broadcast %cst : f32 to vector<128x8xf32>
    %c0 = arith.constant 0 : index
    %c0_0 = arith.constant 0 : index
    %c0_1 = arith.constant 0 : index
    %c0_2 = arith.constant 0 : index
    %1 = vector.load %arg2[%c0, %c0_0, %c0_1, %c0_2] : memref<1x10x18x4xf32, #tpu.memory_space<vmem>>, vector<1x8x16x4xf32>
    %2 = vector.shape_cast %1 : vector<1x8x16x4xf32> to vector<8x16x4xf32>
    %3 = vector.shape_cast %2 : vector<8x16x4xf32> to vector<128x4xf32>
    %c0_3 = arith.constant 0 : index
    %c0_4 = arith.constant 0 : index
    %c0_5 = arith.constant 0 : index
    %4 = vector.load %arg3[%c0_3, %c0_4, %c0_5] : memref<9x4x8xf32, #tpu.memory_space<vmem>>, vector<1x4x8xf32>
    %5 = vector.shape_cast %4 : vector<1x4x8xf32> to vector<4x8xf32>
    %cst_6 = arith.constant dense<0.000000e+00> : vector<128x8xf32>
    %6 = tpu.matmul %3, %5, %cst_6 {dimension_numbers = #tpu.dot_dimension_numbers<[1], [0], [0], [1], [0, 0, 1, 1], [], []>} : vector<128x4xf32>, vector<4x8xf32>, vector<128x8xf32> -> vector<128x8xf32>
    %7 = arith.addf %0, %6 : vector<128x8xf32>
    %c0_7 = arith.constant 0 : index
    %c0_8 = arith.constant 0 : index
    %c1 = arith.constant 1 : index
    %c0_9 = arith.constant 0 : index
    %8 = vector.load %arg2[%c0_7, %c0_8, %c1, %c0_9] : memref<1x10x18x4xf32, #tpu.memory_space<vmem>>, vector<1x8x16x4xf32>
    %9 = vector.shape_cast %8 : vector<1x8x16x4xf32> to vector<8x16x4xf32>
    %10 = vector.shape_cast %9 : vector<8x16x4xf32> to vector<128x4xf32>
    %c1_10 = arith.constant 1 : index
    %c0_11 = arith.constant 0 : index
    %c0_12 = arith.constant 0 : index
    %11 = vector.load %arg3[%c1_10, %c0_11, %c0_12] : memref<9x4x8xf32, #tpu.memory_space<vmem>>, vector<1x4x8xf32>
    %12 = vector.shape_cast %11 : vector<1x4x8xf32> to vector<4x8xf32>
    %cst_13 = arith.constant dense<0.000000e+00> : vector<128x8xf32>
    %13 = tpu.matmul %10, %12, %cst_13 {dimension_numbers = #tpu.dot_dimension_numbers<[1], [0], [0], [1], [0, 0, 1, 1], [], []>} : vector<128x4xf32>, vector<4x8xf32>, vector<128x8xf32> -> vector<128x8xf32>
    %14 = arith.addf %7, %13 : vector<128x8xf32>
    %c0_14 = arith.constant 0 : index
    %c0_15 = arith.constant 0 : index
    %c2 = arith.constant 2 : index
    %c0_16 = arith.constant 0 : index
    %15 = vector.load %arg2[%c0_14, %c0_15, %c2, %c0_16] : memref<1x10x18x4xf32, #tpu.memory_space<vmem>>, vector<1x8x16x4xf32>
    %16 = vector.shape_cast %15 : vector<1x8x16x4xf32> to vector<8x16x4xf32>
    %17 = vector.shape_cast %16 : vector<8x16x4xf32> to vector<128x4xf32>
    %c2_17 = arith.constant 2 : index
    %c0_18 = arith.constant 0 : index
    %c0_19 = arith.constant 0 : index
    %18 = vector.load %arg3[%c2_17, %c0_18, %c0_19] : memref<9x4x8xf32, #tpu.memory_space<vmem>>, vector<1x4x8xf32>
    %19 = vector.shape_cast %18 : vector<1x4x8xf32> to vector<4x8xf32>
    %cst_20 = arith.constant dense<0.000000e+00> : vector<128x8xf32>
    %20 = tpu.matmul %17, %19, %cst_20 {dimension_numbers = #tpu.dot_dimension_numbers<[1], [0], [0], [1], [0, 0, 1, 1], [], []>} : vector<128x4xf32>, vector<4x8xf32>, vector<128x8xf32> -> vector<128x8xf32>
    %21 = arith.addf %14, %20 : vector<128x8xf32>
    %c0_21 = arith.constant 0 : index
    %c1_22 = arith.constant 1 : index
    %c0_23 = arith.constant 0 : index
    %c0_24 = arith.constant 0 : index
    %22 = vector.load %arg2[%c0_21, %c1_22, %c0_23, %c0_24] : memref<1x10x18x4xf32, #tpu.memory_space<vmem>>, vector<1x8x16x4xf32>
    %23 = vector.shape_cast %22 : vector<1x8x16x4xf32> to vector<8x16x4xf32>
    %24 = vector.shape_cast %23 : vector<8x16x4xf32> to vector<128x4xf32>
    %c3 = arith.constant 3 : index
    %c0_25 = arith.constant 0 : index
    %c0_26 = arith.constant 0 : index
    %25 = vector.load %arg3[%c3, %c0_25, %c0_26] : memref<9x4x8xf32, #tpu.memory_space<vmem>>, vector<1x4x8xf32>
    %26 = vector.shape_cast %25 : vector<1x4x8xf32> to vector<4x8xf32>
    %cst_27 = arith.constant dense<0.000000e+00> : vector<128x8xf32>
    %27 = tpu.matmul %24, %26, %cst_27 {dimension_numbers = #tpu.dot_dimension_numbers<[1], [0], [0], [1], [0, 0, 1, 1], [], []>} : vector<128x4xf32>, vector<4x8xf32>, vector<128x8xf32> -> vector<128x8xf32>
    %28 = arith.addf %21, %27 : vector<128x8xf32>
    %c0_28 = arith.constant 0 : index
    %c1_29 = arith.constant 1 : index
    %c1_30 = arith.constant 1 : index
    %c0_31 = arith.constant 0 : index
    %29 = vector.load %arg2[%c0_28, %c1_29, %c1_30, %c0_31] : memref<1x10x18x4xf32, #tpu.memory_space<vmem>>, vector<1x8x16x4xf32>
    %30 = vector.shape_cast %29 : vector<1x8x16x4xf32> to vector<8x16x4xf32>
    %31 = vector.shape_cast %30 : vector<8x16x4xf32> to vector<128x4xf32>
    %c4 = arith.constant 4 : index
    %c0_32 = arith.constant 0 : index
    %c0_33 = arith.constant 0 : index
    %32 = vector.load %arg3[%c4, %c0_32, %c0_33] : memref<9x4x8xf32, #tpu.memory_space<vmem>>, vector<1x4x8xf32>
    %33 = vector.shape_cast %32 : vector<1x4x8xf32> to vector<4x8xf32>
    %cst_34 = arith.constant dense<0.000000e+00> : vector<128x8xf32>
    %34 = tpu.matmul %31, %33, %cst_34 {dimension_numbers = #tpu.dot_dimension_numbers<[1], [0], [0], [1], [0, 0, 1, 1], [], []>} : vector<128x4xf32>, vector<4x8xf32>, vector<128x8xf32> -> vector<128x8xf32>
    %35 = arith.addf %28, %34 : vector<128x8xf32>
    %c0_35 = arith.constant 0 : index
    %c1_36 = arith.constant 1 : index
    %c2_37 = arith.constant 2 : index
    %c0_38 = arith.constant 0 : index
    %36 = vector.load %arg2[%c0_35, %c1_36, %c2_37, %c0_38] : memref<1x10x18x4xf32, #tpu.memory_space<vmem>>, vector<1x8x16x4xf32>
    %37 = vector.shape_cast %36 : vector<1x8x16x4xf32> to vector<8x16x4xf32>
    %38 = vector.shape_cast %37 : vector<8x16x4xf32> to vector<128x4xf32>
    %c5 = arith.constant 5 : index
    %c0_39 = arith.constant 0 : index
    %c0_40 = arith.constant 0 : index
    %39 = vector.load %arg3[%c5, %c0_39, %c0_40] : memref<9x4x8xf32, #tpu.memory_space<vmem>>, vector<1x4x8xf32>
    %40 = vector.shape_cast %39 : vector<1x4x8xf32> to vector<4x8xf32>
    %cst_41 = arith.constant dense<0.000000e+00> : vector<128x8xf32>
    %41 = tpu.matmul %38, %40, %cst_41 {dimension_numbers = #tpu.dot_dimension_numbers<[1], [0], [0], [1], [0, 0, 1, 1], [], []>} : vector<128x4xf32>, vector<4x8xf32>, vector<128x8xf32> -> vector<128x8xf32>
    %42 = arith.addf %35, %41 : vector<128x8xf32>
    %c0_42 = arith.constant 0 : index
    %c2_43 = arith.constant 2 : index
    %c0_44 = arith.constant 0 : index
    %c0_45 = arith.constant 0 : index
    %43 = vector.load %arg2[%c0_42, %c2_43, %c0_44, %c0_45] : memref<1x10x18x4xf32, #tpu.memory_space<vmem>>, vector<1x8x16x4xf32>
    %44 = vector.shape_cast %43 : vector<1x8x16x4xf32> to vector<8x16x4xf32>
    %45 = vector.shape_cast %44 : vector<8x16x4xf32> to vector<128x4xf32>
    %c6 = arith.constant 6 : index
    %c0_46 = arith.constant 0 : index
    %c0_47 = arith.constant 0 : index
    %46 = vector.load %arg3[%c6, %c0_46, %c0_47] : memref<9x4x8xf32, #tpu.memory_space<vmem>>, vector<1x4x8xf32>
    %47 = vector.shape_cast %46 : vector<1x4x8xf32> to vector<4x8xf32>
    %cst_48 = arith.constant dense<0.000000e+00> : vector<128x8xf32>
    %48 = tpu.matmul %45, %47, %cst_48 {dimension_numbers = #tpu.dot_dimension_numbers<[1], [0], [0], [1], [0, 0, 1, 1], [], []>} : vector<128x4xf32>, vector<4x8xf32>, vector<128x8xf32> -> vector<128x8xf32>
    %49 = arith.addf %42, %48 : vector<128x8xf32>
    %c0_49 = arith.constant 0 : index
    %c2_50 = arith.constant 2 : index
    %c1_51 = arith.constant 1 : index
    %c0_52 = arith.constant 0 : index
    %50 = vector.load %arg2[%c0_49, %c2_50, %c1_51, %c0_52] : memref<1x10x18x4xf32, #tpu.memory_space<vmem>>, vector<1x8x16x4xf32>
    %51 = vector.shape_cast %50 : vector<1x8x16x4xf32> to vector<8x16x4xf32>
    %52 = vector.shape_cast %51 : vector<8x16x4xf32> to vector<128x4xf32>
    %c7 = arith.constant 7 : index
    %c0_53 = arith.constant 0 : index
    %c0_54 = arith.constant 0 : index
    %53 = vector.load %arg3[%c7, %c0_53, %c0_54] : memref<9x4x8xf32, #tpu.memory_space<vmem>>, vector<1x4x8xf32>
    %54 = vector.shape_cast %53 : vector<1x4x8xf32> to vector<4x8xf32>
    %cst_55 = arith.constant dense<0.000000e+00> : vector<128x8xf32>
    %55 = tpu.matmul %52, %54, %cst_55 {dimension_numbers = #tpu.dot_dimension_numbers<[1], [0], [0], [1], [0, 0, 1, 1], [], []>} : vector<128x4xf32>, vector<4x8xf32>, vector<128x8xf32> -> vector<128x8xf32>
    %56 = arith.addf %49, %55 : vector<128x8xf32>
    %c0_56 = arith.constant 0 : index
    %c2_57 = arith.constant 2 : index
    %c2_58 = arith.constant 2 : index
    %c0_59 = arith.constant 0 : index
    %57 = vector.load %arg2[%c0_56, %c2_57, %c2_58, %c0_59] : memref<1x10x18x4xf32, #tpu.memory_space<vmem>>, vector<1x8x16x4xf32>
    %58 = vector.shape_cast %57 : vector<1x8x16x4xf32> to vector<8x16x4xf32>
    %59 = vector.shape_cast %58 : vector<8x16x4xf32> to vector<128x4xf32>
    %c8 = arith.constant 8 : index
    %c0_60 = arith.constant 0 : index
    %c0_61 = arith.constant 0 : index
    %60 = vector.load %arg3[%c8, %c0_60, %c0_61] : memref<9x4x8xf32, #tpu.memory_space<vmem>>, vector<1x4x8xf32>
    %61 = vector.shape_cast %60 : vector<1x4x8xf32> to vector<4x8xf32>
    %cst_62 = arith.constant dense<0.000000e+00> : vector<128x8xf32>
    %62 = tpu.matmul %59, %61, %cst_62 {dimension_numbers = #tpu.dot_dimension_numbers<[1], [0], [0], [1], [0, 0, 1, 1], [], []>} : vector<128x4xf32>, vector<4x8xf32>, vector<128x8xf32> -> vector<128x8xf32>
    %63 = arith.addf %56, %62 : vector<128x8xf32>
    %c0_63 = arith.constant 0 : index
    %c0_64 = arith.constant 0 : index
    %64 = vector.load %arg4[%c0_63, %c0_64] : memref<1x8xf32, #tpu.memory_space<vmem>>, vector<1x8xf32>
    %65 = vector.broadcast %64 : vector<1x8xf32> to vector<128x8xf32>
    %66 = arith.addf %63, %65 : vector<128x8xf32>
    %67 = arith.negf %66 : vector<128x8xf32>
    %68 = math.exp %67 : vector<128x8xf32>
    %cst_65 = arith.constant 1.000000e+00 : f32
    %69 = vector.broadcast %cst_65 : f32 to vector<128x8xf32>
    %70 = arith.addf %69, %68 : vector<128x8xf32>
    %71 = arith.divf %69, %70 : vector<128x8xf32>
    %72 = arith.mulf %66, %71 : vector<128x8xf32>
    %73 = vector.shape_cast %72 : vector<128x8xf32> to vector<8x16x8xf32>
    %c0_66 = arith.constant 0 : index
    %c0_67 = arith.constant 0 : index
    %c0_68 = arith.constant 0 : index
    %c0_69 = arith.constant 0 : index
    %74 = vector.load %arg5[%c0_66, %c0_67, %c0_68, %c0_69] : memref<1x8x16x8xf32, #tpu.memory_space<vmem>>, vector<1x8x16x8xf32>
    %75 = vector.shape_cast %74 : vector<1x8x16x8xf32> to vector<8x16x8xf32>
    %76 = vector.shape_cast %73 : vector<8x16x8xf32> to vector<1x8x16x8xf32>
    tpu.vector_store %arg5[%c0_66, %c0_67, %c0_68, %c0_69], %76 {strides = array<i32>} : memref<1x8x16x8xf32, #tpu.memory_space<vmem>>, vector<1x8x16x8xf32>,
    return
  }
  func.func @transform_0(%arg0: i32, %arg1: i32) -> (i32, i32, i32, i32) {
    %c2_i32 = arith.constant 2 : i32
    %0 = arith.muli %arg0, %c2_i32 : i32
    %1 = arith.addi %0, %arg1 : i32
    %c0_i32 = arith.constant 0 : i32
    %c0_i32_0 = arith.constant 0 : i32
    %c0_i32_1 = arith.constant 0 : i32
    %c0_i32_2 = arith.constant 0 : i32
    return %1, %c0_i32, %c0_i32_0, %c0_i32_1 : i32, i32, i32, i32
  }
  func.func @transform_1(%arg0: i32, %arg1: i32) -> (i32, i32, i32) {
    %c0_i32 = arith.constant 0 : i32
    %c0_i32_0 = arith.constant 0 : i32
    %c0_i32_1 = arith.constant 0 : i32
    %c0_i32_2 = arith.constant 0 : i32
    return %c0_i32, %c0_i32_0, %c0_i32_1 : i32, i32, i32
  }
  func.func @transform_2(%arg0: i32, %arg1: i32) -> (i32, i32) {
    %c0_i32 = arith.constant 0 : i32
    %c0_i32_0 = arith.constant 0 : i32
    %c0_i32_1 = arith.constant 0 : i32
    return %c0_i32, %c0_i32_0 : i32, i32
  }
  func.func @transform_3(%arg0: i32, %arg1: i32) -> (i32, i32, i32, i32) {
    %c0_i32 = arith.constant 0 : i32
    %c0_i32_0 = arith.constant 0 : i32
    %c0_i32_1 = arith.constant 0 : i32
    return %arg0, %arg1, %c0_i32, %c0_i32_0 : i32, i32, i32, i32
  }
}

</mosaic_0001>

<llo_original>
// kernel: tpu_custom_call.1
$region0: #{tpu_custom_call.1}
  #allocation0 [shape = 'u32[]', space=smem, size = 0x4, offset = 0x4, fixed_abs, tag = 'smem constant byte address 0x4 - core index']
  #allocation1 [shape = 'u32[144,128]{1,0:T(1,128)}', space=vmem, size = 0x12000, scoped, tag = 'internal scratch']
  %s0 = inlined_call_operand.vmem [shape: f32[4,10,18,4], index: 0, kind: input, shape index: {}]
  %s1 = inlined_call_operand.vmem [shape: f32[9,4,8], index: 1, kind: input, shape index: {}]
  %s2 = inlined_call_operand.vmem [shape: f32[1,8], index: 2, kind: input, shape index: {}]
  %s3 = inlined_call_operand.vmem [shape: f32[2,16,16,8], index: 3, kind: output, shape index: {}]
  %s4 = sld [smem:[#allocation0]]
  $region45: #{tpu_custom_call.1} parent=0
    _
  %s6 = ssub.s32 1, %s4
  %s7 = scalar_select 0, %s6, %s4
  loop: start=0, step=1, limit=6
  $region2: #{tpu_custom_call.1} parent=0 // loop_pre_header
    _
  $region3: #{tpu_custom_call.1} parent=0 // loop_header
    %s9 = sphi 0, %s13
    %p10 = scmp.ge.s32.totalorder %s9, 6
    %s16 = sphi 0, %s28
    %s17 = sphi 0, %s24
    %s18 = sphi 0, %s16
    %s19 = sphi 0, %s17
    %s20 = sphi 0, %s18
    %s21 = sphi 0, %s19
    %s35 = sphi 0, %s37
    %s38 = sphi 0, %s35
    %s39 = sphi 0, %s38
    %s55 = sphi 0, %s39
    %s59 = sphi 0, %s59
    %s61 = sphi 0, %s59
    %s62 = sphi 0, %s61
    %s76 = sphi 0, %s62
    %s80 = sphi 0, %s80
    %s82 = sphi 0, %s80
    %s83 = sphi 0, %s82
    %s97 = sphi 0, %s83
    %s105 = sphi 0, %s107
    %s108 = sphi 0, %s105
    %s109 = sphi 0, %s108
    %s125 = sphi 0, %s109
  $region4: #{tpu_custom_call.1} parent=0 // loop_header_branch
    %12 = sbr.rel (%p10) target = $region8
  $region5: #{tpu_custom_call.1} parent=0 // loop_body
    %s14 = ssub.s32 %s9, 1
    %s15 = ssub.s32 %s9, 2
    %s22 = sadd.s32 1, %s17
    %p23 = scmp.ge.s32.totalorder %s22, 2
    %s24 = scalar_select %p23, 0, %s22
    %s25 = sadd.s32 1, %s16
    %s26 = scalar_select %p23, %s25, %s16
    %p27 = scmp.ge.s32.totalorder %s26, 2
    %s28 = scalar_select %p27, 0, %s26
    %s29 = smul.u32 %s16, 2
    %s30 = sadd.s32 %s29, %s17
    %s31 = smul.u32 %s28, 2
    %s32 = sadd.s32 %s31, %s24
    %s33 = ssub.s32 %s30, %s32
    %p34 = scmp.eq.s32.totalorder %s33, 0
    %s36 = sadd.s32 %s35, 1
    %s37 = scalar_select %p34, %s35, %s36
    %p40 = pneg %p34
    %p41 = scmp.eq.s32.totalorder %s9, 3
    %p42 = por %p40, %p41
    %p43 = scmp.ne.s32.totalorder %s35, %s38
    %p44 = scmp.eq.s32.totalorder %s9, 0
    %p45 = por %p43, %p44
    %p46 = scmp.ne.s32.totalorder %s35, %s38
    %p47 = scmp.eq.s32.totalorder %s14, 3
    %p48 = por %p46, %p47
    %p49 = scmp.ne.s32.totalorder %s38, %s39
    %p50 = scmp.eq.s32.totalorder %s14, 0
    %p51 = por %p49, %p50
    %p52 = scmp.ne.s32.totalorder %s38, %s39
    %p53 = scmp.eq.s32.totalorder %s15, 3
    %p54 = por %p52, %p53
    %p56 = scmp.ne.s32.totalorder %s39, %s55
    %p57 = scmp.eq.s32.totalorder %s15, 0
    %p58 = por %p56, %p57
    %s60 = sadd.s32 %s59, 1
    %p63 = scmp.eq.s32.totalorder %s9, 3
    %p64 = scmp.ne.s32.totalorder %s59, %s61
    %p65 = scmp.eq.s32.totalorder %s9, 0
    %p66 = por %p64, %p65
    %p67 = scmp.ne.s32.totalorder %s59, %s61
    %p68 = scmp.eq.s32.totalorder %s14, 3
    %p69 = por %p67, %p68
    %p70 = scmp.ne.s32.totalorder %s61, %s62
    %p71 = scmp.eq.s32.totalorder %s14, 0
    %p72 = por %p70, %p71
    %p73 = scmp.ne.s32.totalorder %s61, %s62
    %p74 = scmp.eq.s32.totalorder %s15, 3
    %p75 = por %p73, %p74
    %p77 = scmp.ne.s32.totalorder %s62, %s76
    %p78 = scmp.eq.s32.totalorder %s15, 0
    %p79 = por %p77, %p78
    %s81 = sadd.s32 %s80, 1
    %p84 = scmp.eq.s32.totalorder %s9, 3
    %p85 = scmp.ne.s32.totalorder %s80, %s82
    %p86 = scmp.eq.s32.totalorder %s9, 0
    %p87 = por %p85, %p86
    %p88 = scmp.ne.s32.totalorder %s80, %s82
    %p89 = scmp.eq.s32.totalorder %s14, 3
    %p90 = por %p88, %p89
    %p91 = scmp.ne.s32.totalorder %s82, %s83
    %p92 = scmp.eq.s32.totalorder %s14, 0
    %p93 = por %p91, %p92
    %p94 = scmp.ne.s32.totalorder %s82, %s83
    %p95 = scmp.eq.s32.totalorder %s15, 3
    %p96 = por %p94, %p95
    %p98 = scmp.ne.s32.totalorder %s83, %s97
    %p99 = scmp.eq.s32.totalorder %s15, 0
    %p100 = por %p98, %p99
    %s101 = ssub.s32 %s16, %s28
    %s102 = ssub.s32 %s17, %s24
    %s103 = sor.u32 %s101, %s102
    %p104 = scmp.eq.s32.totalorder %s103, 0
    %s106 = sadd.s32 %s105, 1
    %s107 = scalar_select %p104, %s105, %s106
    %p110 = pneg %p104
    %p111 = scmp.eq.s32.totalorder %s9, 3
    %p112 = por %p110, %p111
    %p113 = scmp.ne.s32.totalorder %s105, %s108
    %p114 = scmp.eq.s32.totalorder %s9, 0
    %p115 = por %p113, %p114
    %p116 = scmp.ne.s32.totalorder %s105, %s108
    %p117 = scmp.eq.s32.totalorder %s14, 3
    %p118 = por %p116, %p117
    %p119 = scmp.ne.s32.totalorder %s108, %s109
    %p120 = scmp.eq.s32.totalorder %s14, 0
    %p121 = por %p119, %p120
    %p122 = scmp.ne.s32.totalorder %s108, %s109
    %p123 = scmp.eq.s32.totalorder %s15, 3
    %p124 = por %p122, %p123
    %p126 = scmp.ne.s32.totalorder %s109, %s125
    %p127 = scmp.eq.s32.totalorder %s15, 0
    %p128 = por %p126, %p127
    %p129 = scmp.le.s32.totalorder 1, %s9
    %p130 = scmp.lt.s32.totalorder %s9, 5
    %p131 = pnand %p129, %p130
    %p132 = pneg %p131
    // Predicated region
    $region9: #{tpu_custom_call.1} parent=5 // pred_check
      _
    $region10: #{tpu_custom_call.1} parent=5 // pred_check_branch
      %134 = sbr.rel (%p131) target = $region12
    $region11: #{tpu_custom_call.1} parent=5 // pred_region
      %s135 = ssub.s32 %s9, 1
      // Predicated region
      $region13: #{tpu_custom_call.1} parent=11 // pred_check
        %p136 = pneg %p72
      $region14: #{tpu_custom_call.1} parent=11 // pred_check_branch
        %138 = sbr.rel (%p136) target = $region16
      $region15: #{tpu_custom_call.1} parent=11 // pred_region
        _
      $region16: #{tpu_custom_call.1} parent=11 // pred_fallthru
        _
      // Predicated region
      $region17: #{tpu_custom_call.1} parent=11 // pred_check
        %p139 = pneg %p93
      $region18: #{tpu_custom_call.1} parent=11 // pred_check_branch
        %141 = sbr.rel (%p139) target = $region20
      $region19: #{tpu_custom_call.1} parent=11 // pred_region
        _
      $region20: #{tpu_custom_call.1} parent=11 // pred_fallthru
        _
    $region12: #{tpu_custom_call.1} parent=5 // pred_fallthru
      _
    %p142 = scmp.lt.s32.totalorder %s9, 4
    // Predicated region
    $region21: #{tpu_custom_call.1} parent=5 // pred_check
      %p143 = pneg %p142
    $region22: #{tpu_custom_call.1} parent=5 // pred_check_branch
      %145 = sbr.rel (%p143) target = $region24
    $region23: #{tpu_custom_call.1} parent=5 // pred_region
      // Predicated region
      $region25: #{tpu_custom_call.1} parent=23 // pred_check
        %p146 = pneg %p45
      $region26: #{tpu_custom_call.1} parent=23 // pred_check_branch
        %148 = sbr.rel (%p146) target = $region28
      $region27: #{tpu_custom_call.1} parent=23 // pred_region
        %s149 = smul.u32 %s16, 2
        %s150 = sadd.s32 %s149, %s17
        %p151 = scmp.lt.s32.totalorder %s150, 3
        %s152 = scalar_select %p151, %s150, 3
        %s153 = smul.addr %s152, 30
        %s154 = smul.addr %s153, 8
        %s155 = scalar_lea.vmem %s0, %s154
        %s156 = smul.u32 %s16, 2
        %s157 = sadd.s32 %s156, %s17
      $region28: #{tpu_custom_call.1} parent=23 // pred_fallthru
        _
    $region24: #{tpu_custom_call.1} parent=5 // pred_fallthru
      _
    %p158 = scmp.le.s32.totalorder 1, %s9
    %p159 = scmp.lt.s32.totalorder %s9, 5
    %p160 = pnand %p158, %p159
    %p161 = pneg %p160
    // Predicated region
    $region29: #{tpu_custom_call.1} parent=5 // pred_check
      _
    $region30: #{tpu_custom_call.1} parent=5 // pred_check_branch
      %163 = sbr.rel (%p160) target = $region32
    $region31: #{tpu_custom_call.1} parent=5 // pred_region
      %s164 = ssub.s32 %s9, 1
      %s165 = smul.u32 %s18, 2
      %s166 = sadd.s32 %s165, %s19
      %p167 = scmp.lt.s32.totalorder %s166, 3
      %s168 = scalar_select %p167, %s166, 3
      %s169 = smul.addr %s168, 30
      %s170 = smul.addr %s169, 8
      %s171 = scalar_lea.vmem %s0, %s170
      %p172 = pneg %p51
      %p173 = pneg %p48
      %p174 = pneg %p72
      %p175 = pneg %p69
      %p176 = pneg %p93
      %p177 = pneg %p90
      %p178 = pneg %p121
      %p179 = pneg %p118
      %s180 = smul.u32 8, %s19
      %p181 = scmp.lt.s32.totalorder %s18, 1
      %s182 = scalar_select %p181, %s18, 1
      %p183 = scmp.lt.s32.totalorder %s180, 15
      %s184 = scalar_select %p183, %s180, 15
      %s185 = smul.addr %s184, 2
      %s186 = smul.addr %s182, 32
      %s187 = sadd.s32 %s185, %s186
      %s188 = smul.addr %s187, 8
      %s189 = scalar_lea.vmem %s3, %s188
      %s190 = smul.u32 %s18, 2
      %s191 = sadd.s32 %s190, %s19
      %p192 = scmp.lt.s32.totalorder %s191, 3
      %s193 = scalar_select %p192, %s191, 3
      %s194 = smul.addr %s193, 30
      %s195 = smul.addr %s194, 8
      %s196 = scalar_lea.vmem %s0, %s195
      %s197 = smul.u32 %s18, 2
      %s198 = sadd.s32 %s197, %s19
      %s199 = smul.u32 8, %s19
      %p200 = scmp.lt.s32.totalorder %s18, 1
      %s201 = scalar_select %p200, %s18, 1
      %p202 = scmp.lt.s32.totalorder %s199, 15
      %s203 = scalar_select %p202, %s199, 15
      %s204 = smul.addr %s203, 2
      %s205 = smul.addr %s201, 32
      %s206 = sadd.s32 %s204, %s205
      %s207 = smul.addr %s206, 8
      %s208 = scalar_lea.vmem %s3, %s207
      %s209 = smul.u32 8, %s19
      %v210 = vld [vmem:[%s196] sm:$0xff]
      %v211 = vld [vmem:[%s196 + $0x8] sm:$0xff]
      %v212 = vld [vmem:[%s196 + $0x18] sm:$0xff]
      %v213 = vld [vmem:[%s196 + $0x20] sm:$0xff]
      %v214 = vld [vmem:[%s196 + $0x30] sm:$0xff]
      %v215 = vld [vmem:[%s196 + $0x38] sm:$0xff]
      %v216 = vld [vmem:[%s196 + $0x48] sm:$0xff]
      %v217 = vld [vmem:[%s196 + $0x50] sm:$0xff]
      %v218 = vld [vmem:[%s196 + $0x60] sm:$0xff]
      %v219 = vld [vmem:[%s196 + $0x68] sm:$0xff]
      %v220 = vld [vmem:[%s196 + $0x78] sm:$0xff]
      %v221 = vld [vmem:[%s196 + $0x80] sm:$0xff]
      %v222 = vld [vmem:[%s196 + $0x90] sm:$0xff]
      %v223 = vld [vmem:[%s196 + $0x98] sm:$0xff]
      %v224 = vld [vmem:[%s196 + $0xa8] sm:$0xff]
      %v225 = vld [vmem:[%s196 + $0xb0] sm:$0xff]
      %v226 = vld [vmem:[%s1] sm:$0xf]
      %v227 = vld [vmem:[%s196 + $0x1] sm:$0xff]
      %v228 = vld [vmem:[%s196 + $0x9] sm:$0xff]
      %v229 = vld [vmem:[%s196 + $0x19] sm:$0xff]
      %v230 = vld [vmem:[%s196 + $0x21] sm:$0xff]
      %v231 = vld [vmem:[%s196 + $0x31] sm:$0xff]
      %v232 = vld [vmem:[%s196 + $0x39] sm:$0xff]
      %v233 = vld [vmem:[%s196 + $0x49] sm:$0xff]
      %v234 = vld [vmem:[%s196 + $0x51] sm:$0xff]
      %v235 = vld [vmem:[%s196 + $0x61] sm:$0xff]
      %v236 = vld [vmem:[%s196 + $0x69] sm:$0xff]
      %v237 = vld [vmem:[%s196 + $0x79] sm:$0xff]
      %v238 = vld [vmem:[%s196 + $0x81] sm:$0xff]
      %v239 = vld [vmem:[%s196 + $0x91] sm:$0xff]
      %v240 = vld [vmem:[%s196 + $0x99] sm:$0xff]
      %v241 = vld [vmem:[%s196 + $0xa9] sm:$0xff]
      %v242 = vld [vmem:[%s196 + $0xb1] sm:$0xff]
      %s243 = scalar_lea.vmem %s1, 4
      %v244 = vld [vmem:[%s243] sm:$0xf]
      %vm245 = vcmask 31744
      %v247 = vsel %vm245, %v227, 0
      %v250 = vsel %vm245, %v228, 0
      %v253 = vsel %vm245, %v229, 0
      %v256 = vsel %vm245, %v230, 0
      %v259 = vsel %vm245, %v231, 0
      %v262 = vsel %vm245, %v232, 0
      %v265 = vsel %vm245, %v233, 0
      %v268 = vsel %vm245, %v234, 0
      %v271 = vsel %vm245, %v235, 0
      %v274 = vsel %vm245, %v236, 0
      %v277 = vsel %vm245, %v237, 0
      %v280 = vsel %vm245, %v238, 0
      %v283 = vsel %vm245, %v239, 0
      %v286 = vsel %vm245, %v240, 0
      %v289 = vsel %vm245, %v241, 0
      %v292 = vsel %vm245, %v242, 0
      %vm294 = vcmask 1043456
      %v296 = vsel %vm294, %v244, 0
      %298 = vmatprep.subr.mxu0 0.0
      %299 = vmatpush1.msra.mxu0 %v296
      %300 = vmatprep.subr.mxu0 0.0
      %301 = vmatpush1.msra.mxu0 0.0
      %302 = vmatprep.subr.mxu0 0.0
      %303 = vmatpush1.msra.mxu0 0.0
      %304 = vmatprep.subr.mxu0 0.0
      %305 = vmatpush1.msra.mxu0 0.0
      %306 = vmatprep.subr.mxu0 0.0
      %307 = vmatpush1.msra.mxu0 0.0
      %308 = vmatprep.subr.mxu0 0.0
      %309 = vmatpush1.msra.mxu0 0.0
      %310 = vmatprep.subr.mxu0 0.0
      %311 = vmatpush1.msra.mxu0 0.0
      %312 = vmatprep.subr.mxu0 0.0
      %313 = vmatpush1.msra.mxu0 0.0
      %314 = vmatprep.subr.mxu0 0.0
      %315 = vmatpush1.msra.mxu0 0.0
      %316 = vmatprep.subr.mxu0 0.0
      %317 = vmatpush1.msra.mxu0 0.0
      %318 = vmatprep.subr.mxu0 0.0
      %319 = vmatpush1.msra.mxu0 0.0
      %320 = vmatprep.subr.mxu0 0.0
      %321 = vmatpush1.msra.mxu0 0.0
      %322 = vmatprep.subr.mxu0 0.0
      %323 = vmatpush1.msra.mxu0 0.0
      %324 = vmatprep.subr.mxu0 0.0
      %325 = vmatpush1.msra.mxu0 0.0
      %326 = vmatprep.subr.mxu0 0.0
      %327 = vmatpush1.msra.mxu0 0.0
      %328 = vmatprep.subr.mxu0 0.0
      %329 = vmatpush1.msra.mxu0 0.0
      %330 = vmatprep.subr.mxu0 0.0
      %331 = vmatpush1.msra.mxu0 0.0
      %332 = vmatprep.subr.mxu0 0.0
      %333 = vmatpush1.msra.mxu0 0.0
      %334 = vmatprep.subr.mxu0 0.0
      %335 = vmatpush1.msra.mxu0 0.0
      %336 = vmatprep.subr.mxu0 0.0
      %337 = vmatpush1.msra.mxu0 0.0
      %338 = vmatprep.subr.mxu0 0.0
      %339 = vmatpush1.msra.mxu0 0.0
      %340 = vmatprep.subr.mxu0 0.0
      %341 = vmatpush1.msra.mxu0 0.0
      %342 = vmatprep.subr.mxu0 0.0
      %343 = vmatpush1.msra.mxu0 0.0
      %344 = vmatprep.subr.mxu0 0.0
      %345 = vmatpush1.msra.mxu0 0.0
      %346 = vmatprep.subr.mxu0 0.0
      %347 = vmatpush1.msra.mxu0 0.0
      %348 = vmatprep.subr.mxu0 0.0
      %349 = vmatpush1.msra.mxu0 0.0
      %350 = vmatprep.subr.mxu0 0.0
      %351 = vmatpush1.msra.mxu0 0.0
      %352 = vmatprep.subr.mxu0 0.0
      %353 = vmatpush1.msra.mxu0 0.0
      %354 = vmatprep.subr.mxu0 0.0
      %355 = vmatpush1.msra.mxu0 0.0
      %356 = vmatprep.subr.mxu0 0.0
      %357 = vmatpush1.msra.mxu0 0.0
      %358 = vmatprep.subr.mxu0 0.0
      %359 = vmatpush1.msra.mxu0 0.0
      %360 = vmatprep.subr.mxu0 0.0
      %361 = vmatpush1.msra.mxu0 0.0
      %362 = vmatprep.mubr.f32.mxu0 0.0
      %363 = vmatmul.mubr.f32.gmra.mrb[0].mxu0 %v247
      %v364 = vpop.f32.mrb[0].mxu0
      %v365 = vadd.f32 0.0, %v364
      %v366 = vpop.f32.mrb[0].mxu0
      %367 = vmatprep.mubr.f32.mxu0 0.0
      %368 = vmatmul.mubr.f32.gmra.mrb[0].mxu0 %v250
      %v369 = vpop.f32.mrb[0].mxu0
      %v370 = vadd.f32 0.0, %v369
      %v371 = vpop.f32.mrb[0].mxu0
      %372 = vmatprep.mubr.f32.mxu0 0.0
      %373 = vmatmul.mubr.f32.gmra.mrb[0].mxu0 %v253
      %v374 = vpop.f32.mrb[0].mxu0
      %v375 = vadd.f32 0.0, %v374
      %v376 = vpop.f32.mrb[0].mxu0
      %377 = vmatprep.mubr.f32.mxu0 0.0
      %378 = vmatmul.mubr.f32.gmra.mrb[0].mxu0 %v256
      %v379 = vpop.f32.mrb[0].mxu0
      %v380 = vadd.f32 0.0, %v379
      %v381 = vpop.f32.mrb[0].mxu0
      %382 = vmatprep.mubr.f32.mxu0 0.0
      %383 = vmatmul.mubr.f32.gmra.mrb[0].mxu0 %v259
      %v384 = vpop.f32.mrb[0].mxu0
      %v385 = vadd.f32 0.0, %v384
      %v386 = vpop.f32.mrb[0].mxu0
      %387 = vmatprep.mubr.f32.mxu0 0.0
      %388 = vmatmul.mubr.f32.gmra.mrb[0].mxu0 %v262
      %v389 = vpop.f32.mrb[0].mxu0
      %v390 = vadd.f32 0.0, %v389
      %v391 = vpop.f32.mrb[0].mxu0
      %392 = vmatprep.mubr.f32.mxu0 0.0
      %393 = vmatmul.mubr.f32.gmra.mrb[0].mxu0 %v265
      %v394 = vpop.f32.mrb[0].mxu0
      %v395 = vadd.f32 0.0, %v394
      %v396 = vpop.f32.mrb[0].mxu0
      %397 = vmatprep.mubr.f32.mxu0 0.0
      %398 = vmatmul.mubr.f32.gmra.mrb[0].mxu0 %v268
      %v399 = vpop.f32.mrb[0].mxu0
      %v400 = vadd.f32 0.0, %v399
      %v401 = vpop.f32.mrb[0].mxu0
      %402 = vmatprep.mubr.f32.mxu0 0.0
      %403 = vmatmul.mubr.f32.gmra.mrb[0].mxu0 %v271
      %v404 = vpop.f32.mrb[0].mxu0
      %v405 = vadd.f32 0.0, %v404
      %v406 = vpop.f32.mrb[0].mxu0
      %407 = vmatprep.mubr.f32.mxu0 0.0
      %408 = vmatmul.mubr.f32.gmra.mrb[0].mxu0 %v274
      %v409 = vpop.f32.mrb[0].mxu0
      %v410 = vadd.f32 0.0, %v409
      %v411 = vpop.f32.mrb[0].mxu0
      %412 = vmatprep.mubr.f32.mxu0 0.0
      %413 = vmatmul.mubr.f32.gmra.mrb[0].mxu0 %v277
      %v414 = vpop.f32.mrb[0].mxu0
      %v415 = vadd.f32 0.0, %v414
      %v416 = vpop.f32.mrb[0].mxu0
      %417 = vmatprep.mubr.f32.mxu0 0.0
      %418 = vmatmul.mubr.f32.gmra.mrb[0].mxu0 %v280
      %v419 = vpop.f32.mrb[0].mxu0
      %v420 = vadd.f32 0.0, %v419
      %v421 = vpop.f32.mrb[0].mxu0
      %422 = vmatprep.mubr.f32.mxu0 0.0
      %423 = vmatmul.mubr.f32.gmra.mrb[0].mxu0 %v283
      %v424 = vpop.f32.mrb[0].mxu0
      %v425 = vadd.f32 0.0, %v424
      %v426 = vpop.f32.mrb[0].mxu0
      %427 = vmatprep.mubr.f32.mxu0 0.0
      %428 = vmatmul.mubr.f32.gmra.mrb[0].mxu0 %v286
      %v429 = vpop.f32.mrb[0].mxu0
      %v430 = vadd.f32 0.0, %v429
      %v431 = vpop.f32.mrb[0].mxu0
      %432 = vmatprep.mubr.f32.mxu0 0.0
      %433 = vmatmul.mubr.f32.gmra.mrb[0].mxu0 %v289
      %v434 = vpop.f32.mrb[0].mxu0
      %v435 = vadd.f32 0.0, %v434
      %v436 = vpop.f32.mrb[0].mxu0
      %437 = vmatprep.mubr.f32.mxu0 0.0
      %438 = vmatmul.mubr.f32.gmra.mrb[0].mxu0 %v292
      %v439 = vpop.f32.mrb[0].mxu0
      %v440 = vadd.f32 0.0, %v439
      %v441 = vpop.f32.mrb[0].mxu0
      %442 = vdwg.mxu0
      %v444 = vsel %vm245, %v210, 0
      %v447 = vsel %vm245, %v211, 0
      %v450 = vsel %vm245, %v212, 0
      %v453 = vsel %vm245, %v213, 0
      %v456 = vsel %vm245, %v214, 0
      %v459 = vsel %vm245, %v215, 0
      %v462 = vsel %vm245, %v216, 0
      %v465 = vsel %vm245, %v217, 0
      %v468 = vsel %vm245, %v218, 0
      %v471 = vsel %vm245, %v219, 0
      %v474 = vsel %vm245, %v220, 0
      %v477 = vsel %vm245, %v221, 0
      %v480 = vsel %vm245, %v222, 0
      %v483 = vsel %vm245, %v223, 0
      %v486 = vsel %vm245, %v224, 0
      %v489 = vsel %vm245, %v225, 0
      %v492 = vsel %vm294, %v226, 0
      %494 = vmatprep.subr.mxu0 0.0
      %495 = vmatpush1.msra.mxu0 %v492
      %496 = vmatprep.subr.mxu0 0.0
      %497 = vmatpush1.msra.mxu0 0.0
      %498 = vmatprep.subr.mxu0 0.0
      %499 = vmatpush1.msra.mxu0 0.0
      %500 = vmatprep.subr.mxu0 0.0
      %501 = vmatpush1.msra.mxu0 0.0
      %502 = vmatprep.subr.mxu0 0.0
      %503 = vmatpush1.msra.mxu0 0.0
      %504 = vmatprep.subr.mxu0 0.0
      %505 = vmatpush1.msra.mxu0 0.0
      %506 = vmatprep.subr.mxu0 0.0
      %507 = vmatpush1.msra.mxu0 0.0
      %508 = vmatprep.subr.mxu0 0.0
      %509 = vmatpush1.msra.mxu0 0.0
      %510 = vmatprep.subr.mxu0 0.0
      %511 = vmatpush1.msra.mxu0 0.0
      %512 = vmatprep.subr.mxu0 0.0
      %513 = vmatpush1.msra.mxu0 0.0
      %514 = vmatprep.subr.mxu0 0.0
      %515 = vmatpush1.msra.mxu0 0.0
      %516 = vmatprep.subr.mxu0 0.0
      %517 = vmatpush1.msra.mxu0 0.0
      %518 = vmatprep.subr.mxu0 0.0
      %519 = vmatpush1.msra.mxu0 0.0
      %520 = vmatprep.subr.mxu0 0.0
      %521 = vmatpush1.msra.mxu0 0.0
      %522 = vmatprep.subr.mxu0 0.0
      %523 = vmatpush1.msra.mxu0 0.0
      %524 = vmatprep.subr.mxu0 0.0
      %525 = vmatpush1.msra.mxu0 0.0
      %526 = vmatprep.subr.mxu0 0.0
      %527 = vmatpush1.msra.mxu0 0.0
      %528 = vmatprep.subr.mxu0 0.0
      %529 = vmatpush1.msra.mxu0 0.0
      %530 = vmatprep.subr.mxu0 0.0
      %531 = vmatpush1.msra.mxu0 0.0
      %532 = vmatprep.subr.mxu0 0.0
      %533 = vmatpush1.msra.mxu0 0.0
      %534 = vmatprep.subr.mxu0 0.0
      %535 = vmatpush1.msra.mxu0 0.0
      %536 = vmatprep.subr.mxu0 0.0
      %537 = vmatpush1.msra.mxu0 0.0
      %538 = vmatprep.subr.mxu0 0.0
      %539 = vmatpush1.msra.mxu0 0.0
      %540 = vmatprep.subr.mxu0 0.0
      %541 = vmatpush1.msra.mxu0 0.0
      %542 = vmatprep.subr.mxu0 0.0
      %543 = vmatpush1.msra.mxu0 0.0
      %544 = vmatprep.subr.mxu0 0.0
      %545 = vmatpush1.msra.mxu0 0.0
      %546 = vmatprep.subr.mxu0 0.0
      %547 = vmatpush1.msra.mxu0 0.0
      %548 = vmatprep.subr.mxu0 0.0
      %549 = vmatpush1.msra.mxu0 0.0
      %550 = vmatprep.subr.mxu0 0.0
      %551 = vmatpush1.msra.mxu0 0.0
      %552 = vmatprep.subr.mxu0 0.0
      %553 = vmatpush1.msra.mxu0 0.0
      %554 = vmatprep.subr.mxu0 0.0
      %555 = vmatpush1.msra.mxu0 0.0
      %556 = vmatprep.subr.mxu0 0.0
      %557 = vmatpush1.msra.mxu0 0.0
      %558 = vmatprep.mubr.f32.mxu0 0.0
      %559 = vmatmul.mubr.f32.gmra.mrb[0].mxu0 %v444
      %v560 = vpop.f32.mrb[0].mxu0
      %v561 = vadd.f32 %v365, %v560
      %v562 = vpop.f32.mrb[0].mxu0
      %563 = vmatprep.mubr.f32.mxu0 0.0
      %564 = vmatmul.mubr.f32.gmra.mrb[0].mxu0 %v447
      %v565 = vpop.f32.mrb[0].mxu0
      %v566 = vadd.f32 %v370, %v565
      %v567 = vpop.f32.mrb[0].mxu0
      %568 = vmatprep.mubr.f32.mxu0 0.0
      %569 = vmatmul.mubr.f32.gmra.mrb[0].mxu0 %v450
      %v570 = vpop.f32.mrb[0].mxu0
      %v571 = vadd.f32 %v375, %v570
      %v572 = vpop.f32.mrb[0].mxu0
      %573 = vmatprep.mubr.f32.mxu0 0.0
      %574 = vmatmul.mubr.f32.gmra.mrb[0].mxu0 %v453
      %v575 = vpop.f32.mrb[0].mxu0
      %v576 = vadd.f32 %v380, %v575
      %v577 = vpop.f32.mrb[0].mxu0
      %578 = vmatprep.mubr.f32.mxu0 0.0
      %579 = vmatmul.mubr.f32.gmra.mrb[0].mxu0 %v456
      %v580 = vpop.f32.mrb[0].mxu0
      %v581 = vadd.f32 %v385, %v580
      %v582 = vpop.f32.mrb[0].mxu0
      %583 = vmatprep.mubr.f32.mxu0 0.0
      %584 = vmatmul.mubr.f32.gmra.mrb[0].mxu0 %v459
      %v585 = vpop.f32.mrb[0].mxu0
      %v586 = vadd.f32 %v390, %v585
      %v587 = vpop.f32.mrb[0].mxu0
      %588 = vmatprep.mubr.f32.mxu0 0.0
      %589 = vmatmul.mubr.f32.gmra.mrb[0].mxu0 %v462
      %v590 = vpop.f32.mrb[0].mxu0
      %v591 = vadd.f32 %v395, %v590
      %v592 = vpop.f32.mrb[0].mxu0
      %593 = vmatprep.mubr.f32.mxu0 0.0
      %594 = vmatmul.mubr.f32.gmra.mrb[0].mxu0 %v465
      %v595 = vpop.f32.mrb[0].mxu0
      %v596 = vadd.f32 %v400, %v595
      %v597 = vpop.f32.mrb[0].mxu0
      %598 = vmatprep.mubr.f32.mxu0 0.0
      %599 = vmatmul.mubr.f32.gmra.mrb[0].mxu0 %v468
      %v600 = vpop.f32.mrb[0].mxu0
      %v601 = vadd.f32 %v405, %v600
      %v602 = vpop.f32.mrb[0].mxu0
      %603 = vmatprep.mubr.f32.mxu0 0.0
      %604 = vmatmul.mubr.f32.gmra.mrb[0].mxu0 %v471
      %v605 = vpop.f32.mrb[0].mxu0
      %v606 = vadd.f32 %v410, %v605
      %v607 = vpop.f32.mrb[0].mxu0
      %608 = vmatprep.mubr.f32.mxu0 0.0
      %609 = vmatmul.mubr.f32.gmra.mrb[0].mxu0 %v474
      %v610 = vpop.f32.mrb[0].mxu0
      %v611 = vadd.f32 %v415, %v610
      %v612 = vpop.f32.mrb[0].mxu0
      %613 = vmatprep.mubr.f32.mxu0 0.0
      %614 = vmatmul.mubr.f32.gmra.mrb[0].mxu0 %v477
      %v615 = vpop.f32.mrb[0].mxu0
      %v616 = vadd.f32 %v420, %v615
      %v617 = vpop.f32.mrb[0].mxu0
      %618 = vmatprep.mubr.f32.mxu0 0.0
      %619 = vmatmul.mubr.f32.gmra.mrb[0].mxu0 %v480
      %v620 = vpop.f32.mrb[0].mxu0
      %v621 = vadd.f32 %v425, %v620
      %v622 = vpop.f32.mrb[0].mxu0
      %623 = vmatprep.mubr.f32.mxu0 0.0
      %624 = vmatmul.mubr.f32.gmra.mrb[0].mxu0 %v483
      %v625 = vpop.f32.mrb[0].mxu0
      %v626 = vadd.f32 %v430, %v625
      %v627 = vpop.f32.mrb[0].mxu0
      %628 = vmatprep.mubr.f32.mxu0 0.0
      %629 = vmatmul.mubr.f32.gmra.mrb[0].mxu0 %v486
      %v630 = vpop.f32.mrb[0].mxu0
      %v631 = vadd.f32 %v435, %v630
      %v632 = vpop.f32.mrb[0].mxu0
      %633 = vmatprep.mubr.f32.mxu0 0.0
      %634 = vmatmul.mubr.f32.gmra.mrb[0].mxu0 %v489
      %v635 = vpop.f32.mrb[0].mxu0
      %v636 = vadd.f32 %v440, %v635
      %v637 = vpop.f32.mrb[0].mxu0
      %638 = vdwg.mxu0
      %v639 = vld [vmem:[%s196 + $0x2] sm:$0xff]
      %v640 = vld [vmem:[%s196 + $0xa] sm:$0xff]
      %v641 = vld [vmem:[%s196 + $0x1a] sm:$0xff]
      %v642 = vld [vmem:[%s196 + $0x22] sm:$0xff]
      %v643 = vld [vmem:[%s196 + $0x32] sm:$0xff]
      %v644 = vld [vmem:[%s196 + $0x3a] sm:$0xff]
      %v645 = vld [vmem:[%s196 + $0x4a] sm:$0xff]
      %v646 = vld [vmem:[%s196 + $0x52] sm:$0xff]
      %v647 = vld [vmem:[%s196 + $0x62] sm:$0xff]
      %v648 = vld [vmem:[%s196 + $0x6a] sm:$0xff]
      %v649 = vld [vmem:[%s196 + $0x7a] sm:$0xff]
      %v650 = vld [vmem:[%s196 + $0x82] sm:$0xff]
      %v651 = vld [vmem:[%s196 + $0x92] sm:$0xff]
      %v652 = vld [vmem:[%s196 + $0x9a] sm:$0xff]
      %v653 = vld [vmem:[%s196 + $0xaa] sm:$0xff]
      %v654 = vld [vmem:[%s196 + $0xb2] sm:$0xff]
      %s655 = scalar_lea.vmem %s1, 8
      %v656 = vld [vmem:[%s655] sm:$0xf]
      %v658 = vsel %vm245, %v639, 0
      %v661 = vsel %vm245, %v640, 0
      %v664 = vsel %vm245, %v641, 0
      %v667 = vsel %vm245, %v642, 0
      %v670 = vsel %vm245, %v643, 0
      %v673 = vsel %vm245, %v644, 0
      %v676 = vsel %vm245, %v645, 0
      %v679 = vsel %vm245, %v646, 0
      %v682 = vsel %vm245, %v647, 0
      %v685 = vsel %vm245, %v648, 0
      %v688 = vsel %vm245, %v649, 0
      %v691 = vsel %vm245, %v650, 0
      %v694 = vsel %vm245, %v651, 0
      %v697 = vsel %vm245, %v652, 0
      %v700 = vsel %vm245, %v653, 0
      %v703 = vsel %vm245, %v654, 0
      %v706 = vsel %vm294, %v656, 0
      %708 = vmatprep.subr.mxu0 0.0
      %709 = vmatpush1.msra.mxu0 %v706
      %710 = vmatprep.subr.mxu0 0.0
      %711 = vmatpush1.msra.mxu0 0.0
      %712 = vmatprep.subr.mxu0 0.0
      %713 = vmatpush1.msra.mxu0 0.0
      %714 = vmatprep.subr.mxu0 0.0
      %715 = vmatpush1.msra.mxu0 0.0
      %716 = vmatprep.subr.mxu0 0.0
      %717 = vmatpush1.msra.mxu0 0.0
      %718 = vmatprep.subr.mxu0 0.0
      %719 = vmatpush1.msra.mxu0 0.0
      %720 = vmatprep.subr.mxu0 0.0
      %721 = vmatpush1.msra.mxu0 0.0
      %722 = vmatprep.subr.mxu0 0.0
      %723 = vmatpush1.msra.mxu0 0.0
      %724 = vmatprep.subr.mxu0 0.0
      %725 = vmatpush1.msra.mxu0 0.0
      %726 = vmatprep.subr.mxu0 0.0
      %727 = vmatpush1.msra.mxu0 0.0
      %728 = vmatprep.subr.mxu0 0.0
      %729 = vmatpush1.msra.mxu0 0.0
      %730 = vmatprep.subr.mxu0 0.0
      %731 = vmatpush1.msra.mxu0 0.0
      %732 = vmatprep.subr.mxu0 0.0
      %733 = vmatpush1.msra.mxu0 0.0
      %734 = vmatprep.subr.mxu0 0.0
      %735 = vmatpush1.msra.mxu0 0.0
      %736 = vmatprep.subr.mxu0 0.0
      %737 = vmatpush1.msra.mxu0 0.0
      %738 = vmatprep.subr.mxu0 0.0
      %739 = vmatpush1.msra.mxu0 0.0
      %740 = vmatprep.subr.mxu0 0.0
      %741 = vmatpush1.msra.mxu0 0.0
      %742 = vmatprep.subr.mxu0 0.0
      %743 = vmatpush1.msra.mxu0 0.0
      %744 = vmatprep.subr.mxu0 0.0
      %745 = vmatpush1.msra.mxu0 0.0
      %746 = vmatprep.subr.mxu0 0.0
      %747 = vmatpush1.msra.mxu0 0.0
      %748 = vmatprep.subr.mxu0 0.0
      %749 = vmatpush1.msra.mxu0 0.0
      %750 = vmatprep.subr.mxu0 0.0
      %751 = vmatpush1.msra.mxu0 0.0
      %752 = vmatprep.subr.mxu0 0.0
      %753 = vmatpush1.msra.mxu0 0.0
      %754 = vmatprep.subr.mxu0 0.0
      %755 = vmatpush1.msra.mxu0 0.0
      %756 = vmatprep.subr.mxu0 0.0
      %757 = vmatpush1.msra.mxu0 0.0
      %758 = vmatprep.subr.mxu0 0.0
      %759 = vmatpush1.msra.mxu0 0.0
      %760 = vmatprep.subr.mxu0 0.0
      %761 = vmatpush1.msra.mxu0 0.0
      %762 = vmatprep.subr.mxu0 0.0
      %763 = vmatpush1.msra.mxu0 0.0
      %764 = vmatprep.subr.mxu0 0.0
      %765 = vmatpush1.msra.mxu0 0.0
      %766 = vmatprep.subr.mxu0 0.0
      %767 = vmatpush1.msra.mxu0 0.0
      %768 = vmatprep.subr.mxu0 0.0
      %769 = vmatpush1.msra.mxu0 0.0
      %770 = vmatprep.subr.mxu0 0.0
      %771 = vmatpush1.msra.mxu0 0.0
      %772 = vmatprep.mubr.f32.mxu0 0.0
      %773 = vmatmul.mubr.f32.gmra.mrb[0].mxu0 %v658
      %v774 = vpop.f32.mrb[0].mxu0
      %v775 = vadd.f32 0.0, %v774
      %v776 = vpop.f32.mrb[0].mxu0
      %777 = vmatprep.mubr.f32.mxu0 0.0
      %778 = vmatmul.mubr.f32.gmra.mrb[0].mxu0 %v661
      %v779 = vpop.f32.mrb[0].mxu0
      %v780 = vadd.f32 0.0, %v779
      %v781 = vpop.f32.mrb[0].mxu0
      %782 = vmatprep.mubr.f32.mxu0 0.0
      %783 = vmatmul.mubr.f32.gmra.mrb[0].mxu0 %v664
      %v784 = vpop.f32.mrb[0].mxu0
      %v785 = vadd.f32 0.0, %v784
      %v786 = vpop.f32.mrb[0].mxu0
      %787 = vmatprep.mubr.f32.mxu0 0.0
      %788 = vmatmul.mubr.f32.gmra.mrb[0].mxu0 %v667
      %v789 = vpop.f32.mrb[0].mxu0
      %v790 = vadd.f32 0.0, %v789
      %v791 = vpop.f32.mrb[0].mxu0
      %792 = vmatprep.mubr.f32.mxu0 0.0
      %793 = vmatmul.mubr.f32.gmra.mrb[0].mxu0 %v670
      %v794 = vpop.f32.mrb[0].mxu0
      %v795 = vadd.f32 0.0, %v794
      %v796 = vpop.f32.mrb[0].mxu0
      %797 = vmatprep.mubr.f32.mxu0 0.0
      %798 = vmatmul.mubr.f32.gmra.mrb[0].mxu0 %v673
      %v799 = vpop.f32.mrb[0].mxu0
      %v800 = vadd.f32 0.0, %v799
      %v801 = vpop.f32.mrb[0].mxu0
      %802 = vmatprep.mubr.f32.mxu0 0.0
      %803 = vmatmul.mubr.f32.gmra.mrb[0].mxu0 %v676
      %v804 = vpop.f32.mrb[0].mxu0
      %v805 = vadd.f32 0.0, %v804
      %v806 = vpop.f32.mrb[0].mxu0
      %807 = vmatprep.mubr.f32.mxu0 0.0
      %808 = vmatmul.mubr.f32.gmra.mrb[0].mxu0 %v679
      %v809 = vpop.f32.mrb[0].mxu0
      %v810 = vadd.f32 0.0, %v809
      %v811 = vpop.f32.mrb[0].mxu0
      %812 = vmatprep.mubr.f32.mxu0 0.0
      %813 = vmatmul.mubr.f32.gmra.mrb[0].mxu0 %v682
      %v814 = vpop.f32.mrb[0].mxu0
      %v815 = vadd.f32 0.0, %v814
      %v816 = vpop.f32.mrb[0].mxu0
      %817 = vmatprep.mubr.f32.mxu0 0.0
      %818 = vmatmul.mubr.f32.gmra.mrb[0].mxu0 %v685
      %v819 = vpop.f32.mrb[0].mxu0
      %v820 = vadd.f32 0.0, %v819
      %v821 = vpop.f32.mrb[0].mxu0
      %822 = vmatprep.mubr.f32.mxu0 0.0
      %823 = vmatmul.mubr.f32.gmra.mrb[0].mxu0 %v688
      %v824 = vpop.f32.mrb[0].mxu0
      %v825 = vadd.f32 0.0, %v824
      %v826 = vpop.f32.mrb[0].mxu0
      %827 = vmatprep.mubr.f32.mxu0 0.0
      %828 = vmatmul.mubr.f32.gmra.mrb[0].mxu0 %v691
      %v829 = vpop.f32.mrb[0].mxu0
      %v830 = vadd.f32 0.0, %v829
      %v831 = vpop.f32.mrb[0].mxu0
      %832 = vmatprep.mubr.f32.mxu0 0.0
      %833 = vmatmul.mubr.f32.gmra.mrb[0].mxu0 %v694
      %v834 = vpop.f32.mrb[0].mxu0
      %v835 = vadd.f32 0.0, %v834
      %v836 = vpop.f32.mrb[0].mxu0
      %837 = vmatprep.mubr.f32.mxu0 0.0
      %838 = vmatmul.mubr.f32.gmra.mrb[0].mxu0 %v697
      %v839 = vpop.f32.mrb[0].mxu0
      %v840 = vadd.f32 0.0, %v839
      %v841 = vpop.f32.mrb[0].mxu0
      %842 = vmatprep.mubr.f32.mxu0 0.0
      %843 = vmatmul.mubr.f32.gmra.mrb[0].mxu0 %v700
      %v844 = vpop.f32.mrb[0].mxu0
      %v845 = vadd.f32 0.0, %v844
      %v846 = vpop.f32.mrb[0].mxu0
      %847 = vmatprep.mubr.f32.mxu0 0.0
      %848 = vmatmul.mubr.f32.gmra.mrb[0].mxu0 %v703
      %v849 = vpop.f32.mrb[0].mxu0
      %v850 = vadd.f32 0.0, %v849
      %v851 = vpop.f32.mrb[0].mxu0
      %852 = vdwg.mxu0
      %v853 = vadd.f32 %v561, %v775
      %v854 = vadd.f32 %v566, %v780
      %v855 = vadd.f32 %v571, %v785
      %v856 = vadd.f32 %v576, %v790
      %v857 = vadd.f32 %v581, %v795
      %v858 = vadd.f32 %v586, %v800
      %v859 = vadd.f32 %v591, %v805
      %v860 = vadd.f32 %v596, %v810
      %v861 = vadd.f32 %v601, %v815
      %v862 = vadd.f32 %v606, %v820
      %v863 = vadd.f32 %v611, %v825
      %v864 = vadd.f32 %v616, %v830
      %v865 = vadd.f32 %v621, %v835
      %v866 = vadd.f32 %v626, %v840
      %v867 = vadd.f32 %v631, %v845
      %v868 = vadd.f32 %v636, %v850
      %s869 = scalar_lea.vmem %s196, 24
      %v870 = vld [vmem:[%s869] sm:$0xff]
      %v871 = vld [vmem:[%s869 + $0x8] sm:$0xff]
      %v872 = vld [vmem:[%s869 + $0x18] sm:$0xff]
      %v873 = vld [vmem:[%s869 + $0x20] sm:$0xff]
      %v874 = vld [vmem:[%s869 + $0x30] sm:$0xff]
      %v875 = vld [vmem:[%s869 + $0x38] sm:$0xff]
      %v876 = vld [vmem:[%s869 + $0x48] sm:$0xff]
      %v877 = vld [vmem:[%s869 + $0x50] sm:$0xff]
      %v878 = vld [vmem:[%s869 + $0x60] sm:$0xff]
      %v879 = vld [vmem:[%s869 + $0x68] sm:$0xff]
      %v880 = vld [vmem:[%s869 + $0x78] sm:$0xff]
      %v881 = vld [vmem:[%s869 + $0x80] sm:$0xff]
      %v882 = vld [vmem:[%s869 + $0x90] sm:$0xff]
      %v883 = vld [vmem:[%s869 + $0x98] sm:$0xff]
      %v884 = vld [vmem:[%s869 + $0xa8] sm:$0xff]
      %v885 = vld [vmem:[%s869 + $0xb0] sm:$0xff]
      %s886 = scalar_lea.vmem %s1, 12
      %v887 = vld [vmem:[%s886] sm:$0xf]
      %v889 = vsel %vm245, %v870, 0
      %v892 = vsel %vm245, %v871, 0
      %v895 = vsel %vm245, %v872, 0
      %v898 = vsel %vm245, %v873, 0
      %v901 = vsel %vm245, %v874, 0
      %v904 = vsel %vm245, %v875, 0
      %v907 = vsel %vm245, %v876, 0
      %v910 = vsel %vm245, %v877, 0
      %v913 = vsel %vm245, %v878, 0
      %v916 = vsel %vm245, %v879, 0
      %v919 = vsel %vm245, %v880, 0
      %v922 = vsel %vm245, %v881, 0
      %v925 = vsel %vm245, %v882, 0
      %v928 = vsel %vm245, %v883, 0
      %v931 = vsel %vm245, %v884, 0
      %v934 = vsel %vm245, %v885, 0
      %v937 = vsel %vm294, %v887, 0
      %939 = vmatprep.subr.mxu0 0.0
      %940 = vmatpush1.msra.mxu0 %v937
      %941 = vmatprep.subr.mxu0 0.0
      %942 = vmatpush1.msra.mxu0 0.0
      %943 = vmatprep.subr.mxu0 0.0
      %944 = vmatpush1.msra.mxu0 0.0
      %945 = vmatprep.subr.mxu0 0.0
      %946 = vmatpush1.msra.mxu0 0.0
      %947 = vmatprep.subr.mxu0 0.0
      %948 = vmatpush1.msra.mxu0 0.0
      %949 = vmatprep.subr.mxu0 0.0
      %950 = vmatpush1.msra.mxu0 0.0
      %951 = vmatprep.subr.mxu0 0.0
      %952 = vmatpush1.msra.mxu0 0.0
      %953 = vmatprep.subr.mxu0 0.0
      %954 = vmatpush1.msra.mxu0 0.0
      %955 = vmatprep.subr.mxu0 0.0
      %956 = vmatpush1.msra.mxu0 0.0
      %957 = vmatprep.subr.mxu0 0.0
      %958 = vmatpush1.msra.mxu0 0.0
      %959 = vmatprep.subr.mxu0 0.0
      %960 = vmatpush1.msra.mxu0 0.0
      %961 = vmatprep.subr.mxu0 0.0
      %962 = vmatpush1.msra.mxu0 0.0
      %963 = vmatprep.subr.mxu0 0.0
      %964 = vmatpush1.msra.mxu0 0.0
      %965 = vmatprep.subr.mxu0 0.0
      %966 = vmatpush1.msra.mxu0 0.0
      %967 = vmatprep.subr.mxu0 0.0
      %968 = vmatpush1.msra.mxu0 0.0
      %969 = vmatprep.subr.mxu0 0.0
      %970 = vmatpush1.msra.mxu0 0.0
      %971 = vmatprep.subr.mxu0 0.0
      %972 = vmatpush1.msra.mxu0 0.0
      %973 = vmatprep.subr.mxu0 0.0
      %974 = vmatpush1.msra.mxu0 0.0
      %975 = vmatprep.subr.mxu0 0.0
      %976 = vmatpush1.msra.mxu0 0.0
      %977 = vmatprep.subr.mxu0 0.0
      %978 = vmatpush1.msra.mxu0 0.0
      %979 = vmatprep.subr.mxu0 0.0
      %980 = vmatpush1.msra.mxu0 0.0
      %981 = vmatprep.subr.mxu0 0.0
      %982 = vmatpush1.msra.mxu0 0.0
      %983 = vmatprep.subr.mxu0 0.0
      %984 = vmatpush1.msra.mxu0 0.0
      %985 = vmatprep.subr.mxu0 0.0
      %986 = vmatpush1.msra.mxu0 0.0
      %987 = vmatprep.subr.mxu0 0.0
      %988 = vmatpush1.msra.mxu0 0.0
      %989 = vmatprep.subr.mxu0 0.0
      %990 = vmatpush1.msra.mxu0 0.0
      %991 = vmatprep.subr.mxu0 0.0
      %992 = vmatpush1.msra.mxu0 0.0
      %993 = vmatprep.subr.mxu0 0.0
      %994 = vmatpush1.msra.mxu0 0.0
      %995 = vmatprep.subr.mxu0 0.0
      %996 = vmatpush1.msra.mxu0 0.0
      %997 = vmatprep.subr.mxu0 0.0
      %998 = vmatpush1.msra.mxu0 0.0
      %999 = vmatprep.subr.mxu0 0.0
      %1000 = vmatpush1.msra.mxu0 0.0
      %1001 = vmatprep.subr.mxu0 0.0
      %1002 = vmatpush1.msra.mxu0 0.0
      %1003 = vmatprep.mubr.f32.mxu0 0.0
      %1004 = vmatmul.mubr.f32.gmra.mrb[0].mxu0 %v889
      %v1005 = vpop.f32.mrb[0].mxu0
      %v1006 = vadd.f32 0.0, %v1005
      %v1007 = vpop.f32.mrb[0].mxu0
      %1008 = vmatprep.mubr.f32.mxu0 0.0
      %1009 = vmatmul.mubr.f32.gmra.mrb[0].mxu0 %v892
      %v1010 = vpop.f32.mrb[0].mxu0
      %v1011 = vadd.f32 0.0, %v1010
      %v1012 = vpop.f32.mrb[0].mxu0
      %1013 = vmatprep.mubr.f32.mxu0 0.0
      %1014 = vmatmul.mubr.f32.gmra.mrb[0].mxu0 %v895
      %v1015 = vpop.f32.mrb[0].mxu0
      %v1016 = vadd.f32 0.0, %v1015
      %v1017 = vpop.f32.mrb[0].mxu0
      %1018 = vmatprep.mubr.f32.mxu0 0.0
      %1019 = vmatmul.mubr.f32.gmra.mrb[0].mxu0 %v898
      %v1020 = vpop.f32.mrb[0].mxu0
      %v1021 = vadd.f32 0.0, %v1020
      %v1022 = vpop.f32.mrb[0].mxu0
      %1023 = vmatprep.mubr.f32.mxu0 0.0
      %1024 = vmatmul.mubr.f32.gmra.mrb[0].mxu0 %v901
      %v1025 = vpop.f32.mrb[0].mxu0
      %v1026 = vadd.f32 0.0, %v1025
      %v1027 = vpop.f32.mrb[0].mxu0
      %1028 = vmatprep.mubr.f32.mxu0 0.0
      %1029 = vmatmul.mubr.f32.gmra.mrb[0].mxu0 %v904
      %v1030 = vpop.f32.mrb[0].mxu0
      %v1031 = vadd.f32 0.0, %v1030
      %v1032 = vpop.f32.mrb[0].mxu0
      %1033 = vmatprep.mubr.f32.mxu0 0.0
      %1034 = vmatmul.mubr.f32.gmra.mrb[0].mxu0 %v907
      %v1035 = vpop.f32.mrb[0].mxu0
      %v1036 = vadd.f32 0.0, %v1035
      %v1037 = vpop.f32.mrb[0].mxu0
      %1038 = vmatprep.mubr.f32.mxu0 0.0
      %1039 = vmatmul.mubr.f32.gmra.mrb[0].mxu0 %v910
      %v1040 = vpop.f32.mrb[0].mxu0
      %v1041 = vadd.f32 0.0, %v1040
      %v1042 = vpop.f32.mrb[0].mxu0
      %1043 = vmatprep.mubr.f32.mxu0 0.0
      %1044 = vmatmul.mubr.f32.gmra.mrb[0].mxu0 %v913
      %v1045 = vpop.f32.mrb[0].mxu0
      %v1046 = vadd.f32 0.0, %v1045
      %v1047 = vpop.f32.mrb[0].mxu0
      %1048 = vmatprep.mubr.f32.mxu0 0.0
      %1049 = vmatmul.mubr.f32.gmra.mrb[0].mxu0 %v916
      %v1050 = vpop.f32.mrb[0].mxu0
      %v1051 = vadd.f32 0.0, %v1050
      %v1052 = vpop.f32.mrb[0].mxu0
      %1053 = vmatprep.mubr.f32.mxu0 0.0
      %1054 = vmatmul.mubr.f32.gmra.mrb[0].mxu0 %v919
      %v1055 = vpop.f32.mrb[0].mxu0
      %v1056 = vadd.f32 0.0, %v1055
      %v1057 = vpop.f32.mrb[0].mxu0
      %1058 = vmatprep.mubr.f32.mxu0 0.0
      %1059 = vmatmul.mubr.f32.gmra.mrb[0].mxu0 %v922
      %v1060 = vpop.f32.mrb[0].mxu0
      %v1061 = vadd.f32 0.0, %v1060
      %v1062 = vpop.f32.mrb[0].mxu0
      %1063 = vmatprep.mubr.f32.mxu0 0.0
      %1064 = vmatmul.mubr.f32.gmra.mrb[0].mxu0 %v925
      %v1065 = vpop.f32.mrb[0].mxu0
      %v1066 = vadd.f32 0.0, %v1065
      %v1067 = vpop.f32.mrb[0].mxu0
      %1068 = vmatprep.mubr.f32.mxu0 0.0
      %1069 = vmatmul.mubr.f32.gmra.mrb[0].mxu0 %v928
      %v1070 = vpop.f32.mrb[0].mxu0
      %v1071 = vadd.f32 0.0, %v1070
      %v1072 = vpop.f32.mrb[0].mxu0
      %1073 = vmatprep.mubr.f32.mxu0 0.0
      %1074 = vmatmul.mubr.f32.gmra.mrb[0].mxu0 %v931
      %v1075 = vpop.f32.mrb[0].mxu0
      %v1076 = vadd.f32 0.0, %v1075
      %v1077 = vpop.f32.mrb[0].mxu0
      %1078 = vmatprep.mubr.f32.mxu0 0.0
      %1079 = vmatmul.mubr.f32.gmra.mrb[0].mxu0 %v934
      %v1080 = vpop.f32.mrb[0].mxu0
      %v1081 = vadd.f32 0.0, %v1080
      %v1082 = vpop.f32.mrb[0].mxu0
      %1083 = vdwg.mxu0
      %v1084 = vadd.f32 %v853, %v1006
      %v1085 = vadd.f32 %v854, %v1011
      %v1086 = vadd.f32 %v855, %v1016
      %v1087 = vadd.f32 %v856, %v1021
      %v1088 = vadd.f32 %v857, %v1026
      %v1089 = vadd.f32 %v858, %v1031
      %v1090 = vadd.f32 %v859, %v1036
      %v1091 = vadd.f32 %v860, %v1041
      %v1092 = vadd.f32 %v861, %v1046
      %v1093 = vadd.f32 %v862, %v1051
      %v1094 = vadd.f32 %v863, %v1056
      %v1095 = vadd.f32 %v864, %v1061
      %v1096 = vadd.f32 %v865, %v1066
      %v1097 = vadd.f32 %v866, %v1071
      %v1098 = vadd.f32 %v867, %v1076
      %v1099 = vadd.f32 %v868, %v1081
      %v1100 = vld [vmem:[%s869 + $0x1] sm:$0xff]
      %v1101 = vld [vmem:[%s869 + $0x9] sm:$0xff]
      %v1102 = vld [vmem:[%s869 + $0x19] sm:$0xff]
      %v1103 = vld [vmem:[%s869 + $0x21] sm:$0xff]
      %v1104 = vld [vmem:[%s869 + $0x31] sm:$0xff]
      %v1105 = vld [vmem:[%s869 + $0x39] sm:$0xff]
      %v1106 = vld [vmem:[%s869 + $0x49] sm:$0xff]
      %v1107 = vld [vmem:[%s869 + $0x51] sm:$0xff]
      %v1108 = vld [vmem:[%s869 + $0x61] sm:$0xff]
      %v1109 = vld [vmem:[%s869 + $0x69] sm:$0xff]
      %v1110 = vld [vmem:[%s869 + $0x79] sm:$0xff]
      %v1111 = vld [vmem:[%s869 + $0x81] sm:$0xff]
      %v1112 = vld [vmem:[%s869 + $0x91] sm:$0xff]
      %v1113 = vld [vmem:[%s869 + $0x99] sm:$0xff]
      %v1114 = vld [vmem:[%s869 + $0xa9] sm:$0xff]
      %v1115 = vld [vmem:[%s869 + $0xb1] sm:$0xff]
      %s1116 = scalar_lea.vmem %s1, 16
      %v1117 = vld [vmem:[%s1116] sm:$0xf]
      %v1119 = vsel %vm245, %v1100, 0
      %v1122 = vsel %vm245, %v1101, 0
      %v1125 = vsel %vm245, %v1102, 0
      %v1128 = vsel %vm245, %v1103, 0
      %v1131 = vsel %vm245, %v1104, 0
      %v1134 = vsel %vm245, %v1105, 0
      %v1137 = vsel %vm245, %v1106, 0
      %v1140 = vsel %vm245, %v1107, 0
      %v1143 = vsel %vm245, %v1108, 0
      %v1146 = vsel %vm245, %v1109, 0
      %v1149 = vsel %vm245, %v1110, 0
      %v1152 = vsel %vm245, %v1111, 0
      %v1155 = vsel %vm245, %v1112, 0
      %v1158 = vsel %vm245, %v1113, 0
      %v1161 = vsel %vm245, %v1114, 0
      %v1164 = vsel %vm245, %v1115, 0
      %v1167 = vsel %vm294, %v1117, 0
      %1169 = vmatprep.subr.mxu0 0.0
      %1170 = vmatpush1.msra.mxu0 %v1167
      %1171 = vmatprep.subr.mxu0 0.0
      %1172 = vmatpush1.msra.mxu0 0.0
      %1173 = vmatprep.subr.mxu0 0.0
      %1174 = vmatpush1.msra.mxu0 0.0
      %1175 = vmatprep.subr.mxu0 0.0
      %1176 = vmatpush1.msra.mxu0 0.0
      %1177 = vmatprep.subr.mxu0 0.0
      %1178 = vmatpush1.msra.mxu0 0.0
      %1179 = vmatprep.subr.mxu0 0.0
      %1180 = vmatpush1.msra.mxu0 0.0
      %1181 = vmatprep.subr.mxu0 0.0
      %1182 = vmatpush1.msra.mxu0 0.0
      %1183 = vmatprep.subr.mxu0 0.0
      %1184 = vmatpush1.msra.mxu0 0.0
      %1185 = vmatprep.subr.mxu0 0.0
      %1186 = vmatpush1.msra.mxu0 0.0
      %1187 = vmatprep.subr.mxu0 0.0
      %1188 = vmatpush1.msra.mxu0 0.0
      %1189 = vmatprep.subr.mxu0 0.0
      %1190 = vmatpush1.msra.mxu0 0.0
      %1191 = vmatprep.subr.mxu0 0.0
      %1192 = vmatpush1.msra.mxu0 0.0
      %1193 = vmatprep.subr.mxu0 0.0
      %1194 = vmatpush1.msra.mxu0 0.0
      %1195 = vmatprep.subr.mxu0 0.0
      %1196 = vmatpush1.msra.mxu0 0.0
      %1197 = vmatprep.subr.mxu0 0.0
      %1198 = vmatpush1.msra.mxu0 0.0
      %1199 = vmatprep.subr.mxu0 0.0
      %1200 = vmatpush1.msra.mxu0 0.0
      %1201 = vmatprep.subr.mxu0 0.0
      %1202 = vmatpush1.msra.mxu0 0.0
      %1203 = vmatprep.subr.mxu0 0.0
      %1204 = vmatpush1.msra.mxu0 0.0
      %1205 = vmatprep.subr.mxu0 0.0
      %1206 = vmatpush1.msra.mxu0 0.0
      %1207 = vmatprep.subr.mxu0 0.0
      %1208 = vmatpush1.msra.mxu0 0.0
      %1209 = vmatprep.subr.mxu0 0.0
      %1210 = vmatpush1.msra.mxu0 0.0
      %1211 = vmatprep.subr.mxu0 0.0
      %1212 = vmatpush1.msra.mxu0 0.0
      %1213 = vmatprep.subr.mxu0 0.0
      %1214 = vmatpush1.msra.mxu0 0.0
      %1215 = vmatprep.subr.mxu0 0.0
      %1216 = vmatpush1.msra.mxu0 0.0
      %1217 = vmatprep.subr.mxu0 0.0
      %1218 = vmatpush1.msra.mxu0 0.0
      %1219 = vmatprep.subr.mxu0 0.0
      %1220 = vmatpush1.msra.mxu0 0.0
      %1221 = vmatprep.subr.mxu0 0.0
      %1222 = vmatpush1.msra.mxu0 0.0
      %1223 = vmatprep.subr.mxu0 0.0
      %1224 = vmatpush1.msra.mxu0 0.0
      %1225 = vmatprep.subr.mxu0 0.0
      %1226 = vmatpush1.msra.mxu0 0.0
      %1227 = vmatprep.subr.mxu0 0.0
      %1228 = vmatpush1.msra.mxu0 0.0
      %1229 = vmatprep.subr.mxu0 0.0
      %1230 = vmatpush1.msra.mxu0 0.0
      %1231 = vmatprep.subr.mxu0 0.0
      %1232 = vmatpush1.msra.mxu0 0.0
      %1233 = vmatprep.mubr.f32.mxu0 0.0
      %1234 = vmatmul.mubr.f32.gmra.mrb[0].mxu0 %v1119
      %v1235 = vpop.f32.mrb[0].mxu0
      %v1236 = vadd.f32 0.0, %v1235
      %v1237 = vpop.f32.mrb[0].mxu0
      %1238 = vmatprep.mubr.f32.mxu0 0.0
      %1239 = vmatmul.mubr.f32.gmra.mrb[0].mxu0 %v1122
      %v1240 = vpop.f32.mrb[0].mxu0
      %v1241 = vadd.f32 0.0, %v1240
      %v1242 = vpop.f32.mrb[0].mxu0
      %1243 = vmatprep.mubr.f32.mxu0 0.0
      %1244 = vmatmul.mubr.f32.gmra.mrb[0].mxu0 %v1125
      %v1245 = vpop.f32.mrb[0].mxu0
      %v1246 = vadd.f32 0.0, %v1245
      %v1247 = vpop.f32.mrb[0].mxu0
      %1248 = vmatprep.mubr.f32.mxu0 0.0
      %1249 = vmatmul.mubr.f32.gmra.mrb[0].mxu0 %v1128
      %v1250 = vpop.f32.mrb[0].mxu0
      %v1251 = vadd.f32 0.0, %v1250
      %v1252 = vpop.f32.mrb[0].mxu0
      %1253 = vmatprep.mubr.f32.mxu0 0.0
      %1254 = vmatmul.mubr.f32.gmra.mrb[0].mxu0 %v1131
      %v1255 = vpop.f32.mrb[0].mxu0
      %v1256 = vadd.f32 0.0, %v1255
      %v1257 = vpop.f32.mrb[0].mxu0
      %1258 = vmatprep.mubr.f32.mxu0 0.0
      %1259 = vmatmul.mubr.f32.gmra.mrb[0].mxu0 %v1134
      %v1260 = vpop.f32.mrb[0].mxu0
      %v1261 = vadd.f32 0.0, %v1260
      %v1262 = vpop.f32.mrb[0].mxu0
      %1263 = vmatprep.mubr.f32.mxu0 0.0
      %1264 = vmatmul.mubr.f32.gmra.mrb[0].mxu0 %v1137
      %v1265 = vpop.f32.mrb[0].mxu0
      %v1266 = vadd.f32 0.0, %v1265
      %v1267 = vpop.f32.mrb[0].mxu0
      %1268 = vmatprep.mubr.f32.mxu0 0.0
      %1269 = vmatmul.mubr.f32.gmra.mrb[0].mxu0 %v1140
      %v1270 = vpop.f32.mrb[0].mxu0
      %v1271 = vadd.f32 0.0, %v1270
      %v1272 = vpop.f32.mrb[0].mxu0
      %1273 = vmatprep.mubr.f32.mxu0 0.0
      %1274 = vmatmul.mubr.f32.gmra.mrb[0].mxu0 %v1143
      %v1275 = vpop.f32.mrb[0].mxu0
      %v1276 = vadd.f32 0.0, %v1275
      %v1277 = vpop.f32.mrb[0].mxu0
      %1278 = vmatprep.mubr.f32.mxu0 0.0
      %1279 = vmatmul.mubr.f32.gmra.mrb[0].mxu0 %v1146
      %v1280 = vpop.f32.mrb[0].mxu0
      %v1281 = vadd.f32 0.0, %v1280
      %v1282 = vpop.f32.mrb[0].mxu0
      %1283 = vmatprep.mubr.f32.mxu0 0.0
      %1284 = vmatmul.mubr.f32.gmra.mrb[0].mxu0 %v1149
      %v1285 = vpop.f32.mrb[0].mxu0
      %v1286 = vadd.f32 0.0, %v1285
      %v1287 = vpop.f32.mrb[0].mxu0
      %1288 = vmatprep.mubr.f32.mxu0 0.0
      %1289 = vmatmul.mubr.f32.gmra.mrb[0].mxu0 %v1152
      %v1290 = vpop.f32.mrb[0].mxu0
      %v1291 = vadd.f32 0.0, %v1290
      %v1292 = vpop.f32.mrb[0].mxu0
      %1293 = vmatprep.mubr.f32.mxu0 0.0
      %1294 = vmatmul.mubr.f32.gmra.mrb[0].mxu0 %v1155
      %v1295 = vpop.f32.mrb[0].mxu0
      %v1296 = vadd.f32 0.0, %v1295
      %v1297 = vpop.f32.mrb[0].mxu0
      %1298 = vmatprep.mubr.f32.mxu0 0.0
      %1299 = vmatmul.mubr.f32.gmra.mrb[0].mxu0 %v1158
      %v1300 = vpop.f32.mrb[0].mxu0
      %v1301 = vadd.f32 0.0, %v1300
      %v1302 = vpop.f32.mrb[0].mxu0
      %1303 = vmatprep.mubr.f32.mxu0 0.0
      %1304 = vmatmul.mubr.f32.gmra.mrb[0].mxu0 %v1161
      %v1305 = vpop.f32.mrb[0].mxu0
      %v1306 = vadd.f32 0.0, %v1305
      %v1307 = vpop.f32.mrb[0].mxu0
      %1308 = vmatprep.mubr.f32.mxu0 0.0
      %1309 = vmatmul.mubr.f32.gmra.mrb[0].mxu0 %v1164
      %v1310 = vpop.f32.mrb[0].mxu0
      %v1311 = vadd.f32 0.0, %v1310
      %v1312 = vpop.f32.mrb[0].mxu0
      %1313 = vdwg.mxu0
      %v1314 = vadd.f32 %v1084, %v1236
      %v1315 = vadd.f32 %v1085, %v1241
      %v1316 = vadd.f32 %v1086, %v1246
      %v1317 = vadd.f32 %v1087, %v1251
      %v1318 = vadd.f32 %v1088, %v1256
      %v1319 = vadd.f32 %v1089, %v1261
      %v1320 = vadd.f32 %v1090, %v1266
      %v1321 = vadd.f32 %v1091, %v1271
      %v1322 = vadd.f32 %v1092, %v1276
      %v1323 = vadd.f32 %v1093, %v1281
      %v1324 = vadd.f32 %v1094, %v1286
      %v1325 = vadd.f32 %v1095, %v1291
      %v1326 = vadd.f32 %v1096, %v1296
      %v1327 = vadd.f32 %v1097, %v1301
      %v1328 = vadd.f32 %v1098, %v1306
      %v1329 = vadd.f32 %v1099, %v1311
      %v1330 = vld [vmem:[%s869 + $0x2] sm:$0xff]
      %v1331 = vld [vmem:[%s869 + $0xa] sm:$0xff]
      %v1332 = vld [vmem:[%s869 + $0x1a] sm:$0xff]
      %v1333 = vld [vmem:[%s869 + $0x22] sm:$0xff]
      %v1334 = vld [vmem:[%s869 + $0x32] sm:$0xff]
      %v1335 = vld [vmem:[%s869 + $0x3a] sm:$0xff]
      %v1336 = vld [vmem:[%s869 + $0x4a] sm:$0xff]
      %v1337 = vld [vmem:[%s869 + $0x52] sm:$0xff]
      %v1338 = vld [vmem:[%s869 + $0x62] sm:$0xff]
      %v1339 = vld [vmem:[%s869 + $0x6a] sm:$0xff]
      %v1340 = vld [vmem:[%s869 + $0x7a] sm:$0xff]
      %v1341 = vld [vmem:[%s869 + $0x82] sm:$0xff]
      %v1342 = vld [vmem:[%s869 + $0x92] sm:$0xff]
      %v1343 = vld [vmem:[%s869 + $0x9a] sm:$0xff]
      %v1344 = vld [vmem:[%s869 + $0xaa] sm:$0xff]
      %v1345 = vld [vmem:[%s869 + $0xb2] sm:$0xff]
      %s1346 = scalar_lea.vmem %s1, 20
      %v1347 = vld [vmem:[%s1346] sm:$0xf]
      %v1349 = vsel %vm245, %v1330, 0
      %v1352 = vsel %vm245, %v1331, 0
      %v1355 = vsel %vm245, %v1332, 0
      %v1358 = vsel %vm245, %v1333, 0
      %v1361 = vsel %vm245, %v1334, 0
      %v1364 = vsel %vm245, %v1335, 0
      %v1367 = vsel %vm245, %v1336, 0
      %v1370 = vsel %vm245, %v1337, 0
      %v1373 = vsel %vm245, %v1338, 0
      %v1376 = vsel %vm245, %v1339, 0
      %v1379 = vsel %vm245, %v1340, 0
      %v1382 = vsel %vm245, %v1341, 0
      %v1385 = vsel %vm245, %v1342, 0
      %v1388 = vsel %vm245, %v1343, 0
      %v1391 = vsel %vm245, %v1344, 0
      %v1394 = vsel %vm245, %v1345, 0
      %v1397 = vsel %vm294, %v1347, 0
      %1399 = vmatprep.subr.mxu0 0.0
      %1400 = vmatpush1.msra.mxu0 %v1397
      %1401 = vmatprep.subr.mxu0 0.0
      %1402 = vmatpush1.msra.mxu0 0.0
      %1403 = vmatprep.subr.mxu0 0.0
      %1404 = vmatpush1.msra.mxu0 0.0
      %1405 = vmatprep.subr.mxu0 0.0
      %1406 = vmatpush1.msra.mxu0 0.0
      %1407 = vmatprep.subr.mxu0 0.0
      %1408 = vmatpush1.msra.mxu0 0.0
      %1409 = vmatprep.subr.mxu0 0.0
      %1410 = vmatpush1.msra.mxu0 0.0
      %1411 = vmatprep.subr.mxu0 0.0
      %1412 = vmatpush1.msra.mxu0 0.0
      %1413 = vmatprep.subr.mxu0 0.0
      %1414 = vmatpush1.msra.mxu0 0.0
      %1415 = vmatprep.subr.mxu0 0.0
      %1416 = vmatpush1.msra.mxu0 0.0
      %1417 = vmatprep.subr.mxu0 0.0
      %1418 = vmatpush1.msra.mxu0 0.0
      %1419 = vmatprep.subr.mxu0 0.0
      %1420 = vmatpush1.msra.mxu0 0.0
      %1421 = vmatprep.subr.mxu0 0.0
      %1422 = vmatpush1.msra.mxu0 0.0
      %1423 = vmatprep.subr.mxu0 0.0
      %1424 = vmatpush1.msra.mxu0 0.0
      %1425 = vmatprep.subr.mxu0 0.0
      %1426 = vmatpush1.msra.mxu0 0.0
      %1427 = vmatprep.subr.mxu0 0.0
      %1428 = vmatpush1.msra.mxu0 0.0
      %1429 = vmatprep.subr.mxu0 0.0
      %1430 = vmatpush1.msra.mxu0 0.0
      %1431 = vmatprep.subr.mxu0 0.0
      %1432 = vmatpush1.msra.mxu0 0.0
      %1433 = vmatprep.subr.mxu0 0.0
      %1434 = vmatpush1.msra.mxu0 0.0
      %1435 = vmatprep.subr.mxu0 0.0
      %1436 = vmatpush1.msra.mxu0 0.0
      %1437 = vmatprep.subr.mxu0 0.0
      %1438 = vmatpush1.msra.mxu0 0.0
      %1439 = vmatprep.subr.mxu0 0.0
      %1440 = vmatpush1.msra.mxu0 0.0
      %1441 = vmatprep.subr.mxu0 0.0
      %1442 = vmatpush1.msra.mxu0 0.0
      %1443 = vmatprep.subr.mxu0 0.0
      %1444 = vmatpush1.msra.mxu0 0.0
      %1445 = vmatprep.subr.mxu0 0.0
      %1446 = vmatpush1.msra.mxu0 0.0
      %1447 = vmatprep.subr.mxu0 0.0
      %1448 = vmatpush1.msra.mxu0 0.0
      %1449 = vmatprep.subr.mxu0 0.0
      %1450 = vmatpush1.msra.mxu0 0.0
      %1451 = vmatprep.subr.mxu0 0.0
      %1452 = vmatpush1.msra.mxu0 0.0
      %1453 = vmatprep.subr.mxu0 0.0
      %1454 = vmatpush1.msra.mxu0 0.0
      %1455 = vmatprep.subr.mxu0 0.0
      %1456 = vmatpush1.msra.mxu0 0.0
      %1457 = vmatprep.subr.mxu0 0.0
      %1458 = vmatpush1.msra.mxu0 0.0
      %1459 = vmatprep.subr.mxu0 0.0
      %1460 = vmatpush1.msra.mxu0 0.0
      %1461 = vmatprep.subr.mxu0 0.0
      %1462 = vmatpush1.msra.mxu0 0.0
      %1463 = vmatprep.mubr.f32.mxu0 0.0
      %1464 = vmatmul.mubr.f32.gmra.mrb[0].mxu0 %v1349
      %v1465 = vpop.f32.mrb[0].mxu0
      %v1466 = vadd.f32 0.0, %v1465
      %v1467 = vpop.f32.mrb[0].mxu0
      %1468 = vmatprep.mubr.f32.mxu0 0.0
      %1469 = vmatmul.mubr.f32.gmra.mrb[0].mxu0 %v1352
      %v1470 = vpop.f32.mrb[0].mxu0
      %v1471 = vadd.f32 0.0, %v1470
      %v1472 = vpop.f32.mrb[0].mxu0
      %1473 = vmatprep.mubr.f32.mxu0 0.0
      %1474 = vmatmul.mubr.f32.gmra.mrb[0].mxu0 %v1355
      %v1475 = vpop.f32.mrb[0].mxu0
      %v1476 = vadd.f32 0.0, %v1475
      %v1477 = vpop.f32.mrb[0].mxu0
      %1478 = vmatprep.mubr.f32.mxu0 0.0
      %1479 = vmatmul.mubr.f32.gmra.mrb[0].mxu0 %v1358
      %v1480 = vpop.f32.mrb[0].mxu0
      %v1481 = vadd.f32 0.0, %v1480
      %v1482 = vpop.f32.mrb[0].mxu0
      %1483 = vmatprep.mubr.f32.mxu0 0.0
      %1484 = vmatmul.mubr.f32.gmra.mrb[0].mxu0 %v1361
      %v1485 = vpop.f32.mrb[0].mxu0
      %v1486 = vadd.f32 0.0, %v1485
      %v1487 = vpop.f32.mrb[0].mxu0
      %1488 = vmatprep.mubr.f32.mxu0 0.0
      %1489 = vmatmul.mubr.f32.gmra.mrb[0].mxu0 %v1364
      %v1490 = vpop.f32.mrb[0].mxu0
      %v1491 = vadd.f32 0.0, %v1490
      %v1492 = vpop.f32.mrb[0].mxu0
      %1493 = vmatprep.mubr.f32.mxu0 0.0
      %1494 = vmatmul.mubr.f32.gmra.mrb[0].mxu0 %v1367
      %v1495 = vpop.f32.mrb[0].mxu0
      %v1496 = vadd.f32 0.0, %v1495
      %v1497 = vpop.f32.mrb[0].mxu0
      %1498 = vmatprep.mubr.f32.mxu0 0.0
      %1499 = vmatmul.mubr.f32.gmra.mrb[0].mxu0 %v1370
      %v1500 = vpop.f32.mrb[0].mxu0
      %v1501 = vadd.f32 0.0, %v1500
      %v1502 = vpop.f32.mrb[0].mxu0
      %1503 = vmatprep.mubr.f32.mxu0 0.0
      %1504 = vmatmul.mubr.f32.gmra.mrb[0].mxu0 %v1373
      %v1505 = vpop.f32.mrb[0].mxu0
      %v1506 = vadd.f32 0.0, %v1505
      %v1507 = vpop.f32.mrb[0].mxu0
      %1508 = vmatprep.mubr.f32.mxu0 0.0
      %1509 = vmatmul.mubr.f32.gmra.mrb[0].mxu0 %v1376
      %v1510 = vpop.f32.mrb[0].mxu0
      %v1511 = vadd.f32 0.0, %v1510
      %v1512 = vpop.f32.mrb[0].mxu0
      %1513 = vmatprep.mubr.f32.mxu0 0.0
      %1514 = vmatmul.mubr.f32.gmra.mrb[0].mxu0 %v1379
      %v1515 = vpop.f32.mrb[0].mxu0
      %v1516 = vadd.f32 0.0, %v1515
      %v1517 = vpop.f32.mrb[0].mxu0
      %1518 = vmatprep.mubr.f32.mxu0 0.0
      %1519 = vmatmul.mubr.f32.gmra.mrb[0].mxu0 %v1382
      %v1520 = vpop.f32.mrb[0].mxu0
      %v1521 = vadd.f32 0.0, %v1520
      %v1522 = vpop.f32.mrb[0].mxu0
      %1523 = vmatprep.mubr.f32.mxu0 0.0
      %1524 = vmatmul.mubr.f32.gmra.mrb[0].mxu0 %v1385
      %v1525 = vpop.f32.mrb[0].mxu0
      %v1526 = vadd.f32 0.0, %v1525
      %v1527 = vpop.f32.mrb[0].mxu0
      %1528 = vmatprep.mubr.f32.mxu0 0.0
      %1529 = vmatmul.mubr.f32.gmra.mrb[0].mxu0 %v1388
      %v1530 = vpop.f32.mrb[0].mxu0
      %v1531 = vadd.f32 0.0, %v1530
      %v1532 = vpop.f32.mrb[0].mxu0
      %1533 = vmatprep.mubr.f32.mxu0 0.0
      %1534 = vmatmul.mubr.f32.gmra.mrb[0].mxu0 %v1391
      %v1535 = vpop.f32.mrb[0].mxu0
      %v1536 = vadd.f32 0.0, %v1535
      %v1537 = vpop.f32.mrb[0].mxu0
      %1538 = vmatprep.mubr.f32.mxu0 0.0
      %1539 = vmatmul.mubr.f32.gmra.mrb[0].mxu0 %v1394
      %v1540 = vpop.f32.mrb[0].mxu0
      %v1541 = vadd.f32 0.0, %v1540
      %v1542 = vpop.f32.mrb[0].mxu0
      %1543 = vdwg.mxu0
      %v1544 = vadd.f32 %v1314, %v1466
      %v1545 = vadd.f32 %v1315, %v1471
      %v1546 = vadd.f32 %v1316, %v1476
      %v1547 = vadd.f32 %v1317, %v1481
      %v1548 = vadd.f32 %v1318, %v1486
      %v1549 = vadd.f32 %v1319, %v1491
      %v1550 = vadd.f32 %v1320, %v1496
      %v1551 = vadd.f32 %v1321, %v1501
      %v1552 = vadd.f32 %v1322, %v1506
      %v1553 = vadd.f32 %v1323, %v1511
      %v1554 = vadd.f32 %v1324, %v1516
      %v1555 = vadd.f32 %v1325, %v1521
      %v1556 = vadd.f32 %v1326, %v1526
      %v1557 = vadd.f32 %v1327, %v1531
      %v1558 = vadd.f32 %v1328, %v1536
      %v1559 = vadd.f32 %v1329, %v1541
      %s1560 = scalar_lea.vmem %s196, 48
      %v1561 = vld [vmem:[%s1560] sm:$0xff]
      %v1562 = vld [vmem:[%s1560 + $0x8] sm:$0xff]
      %v1563 = vld [vmem:[%s1560 + $0x18] sm:$0xff]
      %v1564 = vld [vmem:[%s1560 + $0x20] sm:$0xff]
      %v1565 = vld [vmem:[%s1560 + $0x30] sm:$0xff]
      %v1566 = vld [vmem:[%s1560 + $0x38] sm:$0xff]
      %v1567 = vld [vmem:[%s1560 + $0x48] sm:$0xff]
      %v1568 = vld [vmem:[%s1560 + $0x50] sm:$0xff]
      %v1569 = vld [vmem:[%s1560 + $0x60] sm:$0xff]
      %v1570 = vld [vmem:[%s1560 + $0x68] sm:$0xff]
      %v1571 = vld [vmem:[%s1560 + $0x78] sm:$0xff]
      %v1572 = vld [vmem:[%s1560 + $0x80] sm:$0xff]
      %v1573 = vld [vmem:[%s1560 + $0x90] sm:$0xff]
      %v1574 = vld [vmem:[%s1560 + $0x98] sm:$0xff]
      %v1575 = vld [vmem:[%s1560 + $0xa8] sm:$0xff]
      %v1576 = vld [vmem:[%s1560 + $0xb0] sm:$0xff]
      %s1577 = scalar_lea.vmem %s1, 24
      %v1578 = vld [vmem:[%s1577] sm:$0xf]
      %v1580 = vsel %vm245, %v1561, 0
      %v1583 = vsel %vm245, %v1562, 0
      %v1586 = vsel %vm245, %v1563, 0
      %v1589 = vsel %vm245, %v1564, 0
      %v1592 = vsel %vm245, %v1565, 0
      %v1595 = vsel %vm245, %v1566, 0
      %v1598 = vsel %vm245, %v1567, 0
      %v1601 = vsel %vm245, %v1568, 0
      %v1604 = vsel %vm245, %v1569, 0
      %v1607 = vsel %vm245, %v1570, 0
      %v1610 = vsel %vm245, %v1571, 0
      %v1613 = vsel %vm245, %v1572, 0
      %v1616 = vsel %vm245, %v1573, 0
      %v1619 = vsel %vm245, %v1574, 0
      %v1622 = vsel %vm245, %v1575, 0
      %v1625 = vsel %vm245, %v1576, 0
      %v1628 = vsel %vm294, %v1578, 0
      %1630 = vmatprep.subr.mxu0 0.0
      %1631 = vmatpush1.msra.mxu0 %v1628
      %1632 = vmatprep.subr.mxu0 0.0
      %1633 = vmatpush1.msra.mxu0 0.0
      %1634 = vmatprep.subr.mxu0 0.0
      %1635 = vmatpush1.msra.mxu0 0.0
      %1636 = vmatprep.subr.mxu0 0.0
      %1637 = vmatpush1.msra.mxu0 0.0
      %1638 = vmatprep.subr.mxu0 0.0
      %1639 = vmatpush1.msra.mxu0 0.0
      %1640 = vmatprep.subr.mxu0 0.0
      %1641 = vmatpush1.msra.mxu0 0.0
      %1642 = vmatprep.subr.mxu0 0.0
      %1643 = vmatpush1.msra.mxu0 0.0
      %1644 = vmatprep.subr.mxu0 0.0
      %1645 = vmatpush1.msra.mxu0 0.0
      %1646 = vmatprep.subr.mxu0 0.0
      %1647 = vmatpush1.msra.mxu0 0.0
      %1648 = vmatprep.subr.mxu0 0.0
      %1649 = vmatpush1.msra.mxu0 0.0
      %1650 = vmatprep.subr.mxu0 0.0
      %1651 = vmatpush1.msra.mxu0 0.0
      %1652 = vmatprep.subr.mxu0 0.0
      %1653 = vmatpush1.msra.mxu0 0.0
      %1654 = vmatprep.subr.mxu0 0.0
      %1655 = vmatpush1.msra.mxu0 0.0
      %1656 = vmatprep.subr.mxu0 0.0
      %1657 = vmatpush1.msra.mxu0 0.0
      %1658 = vmatprep.subr.mxu0 0.0
      %1659 = vmatpush1.msra.mxu0 0.0
      %1660 = vmatprep.subr.mxu0 0.0
      %1661 = vmatpush1.msra.mxu0 0.0
      %1662 = vmatprep.subr.mxu0 0.0
      %1663 = vmatpush1.msra.mxu0 0.0
      %1664 = vmatprep.subr.mxu0 0.0
      %1665 = vmatpush1.msra.mxu0 0.0
      %1666 = vmatprep.subr.mxu0 0.0
      %1667 = vmatpush1.msra.mxu0 0.0
      %1668 = vmatprep.subr.mxu0 0.0
      %1669 = vmatpush1.msra.mxu0 0.0
      %1670 = vmatprep.subr.mxu0 0.0
      %1671 = vmatpush1.msra.mxu0 0.0
      %1672 = vmatprep.subr.mxu0 0.0
      %1673 = vmatpush1.msra.mxu0 0.0
      %1674 = vmatprep.subr.mxu0 0.0
      %1675 = vmatpush1.msra.mxu0 0.0
      %1676 = vmatprep.subr.mxu0 0.0
      %1677 = vmatpush1.msra.mxu0 0.0
      %1678 = vmatprep.subr.mxu0 0.0
      %1679 = vmatpush1.msra.mxu0 0.0
      %1680 = vmatprep.subr.mxu0 0.0
      %1681 = vmatpush1.msra.mxu0 0.0
      %1682 = vmatprep.subr.mxu0 0.0
      %1683 = vmatpush1.msra.mxu0 0.0
      %1684 = vmatprep.subr.mxu0 0.0
      %1685 = vmatpush1.msra.mxu0 0.0
      %1686 = vmatprep.subr.mxu0 0.0
      %1687 = vmatpush1.msra.mxu0 0.0
      %1688 = vmatprep.subr.mxu0 0.0
      %1689 = vmatpush1.msra.mxu0 0.0
      %1690 = vmatprep.subr.mxu0 0.0
      %1691 = vmatpush1.msra.mxu0 0.0
      %1692 = vmatprep.subr.mxu0 0.0
      %1693 = vmatpush1.msra.mxu0 0.0
      %1694 = vmatprep.mubr.f32.mxu0 0.0
      %1695 = vmatmul.mubr.f32.gmra.mrb[0].mxu0 %v1580
      %v1696 = vpop.f32.mrb[0].mxu0
      %v1697 = vadd.f32 0.0, %v1696
      %v1698 = vpop.f32.mrb[0].mxu0
      %1699 = vmatprep.mubr.f32.mxu0 0.0
      %1700 = vmatmul.mubr.f32.gmra.mrb[0].mxu0 %v1583
      %v1701 = vpop.f32.mrb[0].mxu0
      %v1702 = vadd.f32 0.0, %v1701
      %v1703 = vpop.f32.mrb[0].mxu0
      %1704 = vmatprep.mubr.f32.mxu0 0.0
      %1705 = vmatmul.mubr.f32.gmra.mrb[0].mxu0 %v1586
      %v1706 = vpop.f32.mrb[0].mxu0
      %v1707 = vadd.f32 0.0, %v1706
      %v1708 = vpop.f32.mrb[0].mxu0
      %1709 = vmatprep.mubr.f32.mxu0 0.0
      %1710 = vmatmul.mubr.f32.gmra.mrb[0].mxu0 %v1589
      %v1711 = vpop.f32.mrb[0].mxu0
      %v1712 = vadd.f32 0.0, %v1711
      %v1713 = vpop.f32.mrb[0].mxu0
      %1714 = vmatprep.mubr.f32.mxu0 0.0
      %1715 = vmatmul.mubr.f32.gmra.mrb[0].mxu0 %v1592
      %v1716 = vpop.f32.mrb[0].mxu0
      %v1717 = vadd.f32 0.0, %v1716
      %v1718 = vpop.f32.mrb[0].mxu0
      %1719 = vmatprep.mubr.f32.mxu0 0.0
      %1720 = vmatmul.mubr.f32.gmra.mrb[0].mxu0 %v1595
      %v1721 = vpop.f32.mrb[0].mxu0
      %v1722 = vadd.f32 0.0, %v1721
      %v1723 = vpop.f32.mrb[0].mxu0
      %1724 = vmatprep.mubr.f32.mxu0 0.0
      %1725 = vmatmul.mubr.f32.gmra.mrb[0].mxu0 %v1598
      %v1726 = vpop.f32.mrb[0].mxu0
      %v1727 = vadd.f32 0.0, %v1726
      %v1728 = vpop.f32.mrb[0].mxu0
      %1729 = vmatprep.mubr.f32.mxu0 0.0
      %1730 = vmatmul.mubr.f32.gmra.mrb[0].mxu0 %v1601
      %v1731 = vpop.f32.mrb[0].mxu0
      %v1732 = vadd.f32 0.0, %v1731
      %v1733 = vpop.f32.mrb[0].mxu0
      %1734 = vmatprep.mubr.f32.mxu0 0.0
      %1735 = vmatmul.mubr.f32.gmra.mrb[0].mxu0 %v1604
      %v1736 = vpop.f32.mrb[0].mxu0
      %v1737 = vadd.f32 0.0, %v1736
      %v1738 = vpop.f32.mrb[0].mxu0
      %1739 = vmatprep.mubr.f32.mxu0 0.0
      %1740 = vmatmul.mubr.f32.gmra.mrb[0].mxu0 %v1607
      %v1741 = vpop.f32.mrb[0].mxu0
      %v1742 = vadd.f32 0.0, %v1741
      %v1743 = vpop.f32.mrb[0].mxu0
      %1744 = vmatprep.mubr.f32.mxu0 0.0
      %1745 = vmatmul.mubr.f32.gmra.mrb[0].mxu0 %v1610
      %v1746 = vpop.f32.mrb[0].mxu0
      %v1747 = vadd.f32 0.0, %v1746
      %v1748 = vpop.f32.mrb[0].mxu0
      %1749 = vmatprep.mubr.f32.mxu0 0.0
      %1750 = vmatmul.mubr.f32.gmra.mrb[0].mxu0 %v1613
      %v1751 = vpop.f32.mrb[0].mxu0
      %v1752 = vadd.f32 0.0, %v1751
      %v1753 = vpop.f32.mrb[0].mxu0
      %1754 = vmatprep.mubr.f32.mxu0 0.0
      %1755 = vmatmul.mubr.f32.gmra.mrb[0].mxu0 %v1616
      %v1756 = vpop.f32.mrb[0].mxu0
      %v1757 = vadd.f32 0.0, %v1756
      %v1758 = vpop.f32.mrb[0].mxu0
      %1759 = vmatprep.mubr.f32.mxu0 0.0
      %1760 = vmatmul.mubr.f32.gmra.mrb[0].mxu0 %v1619
      %v1761 = vpop.f32.mrb[0].mxu0
      %v1762 = vadd.f32 0.0, %v1761
      %v1763 = vpop.f32.mrb[0].mxu0
      %1764 = vmatprep.mubr.f32.mxu0 0.0
      %1765 = vmatmul.mubr.f32.gmra.mrb[0].mxu0 %v1622
      %v1766 = vpop.f32.mrb[0].mxu0
      %v1767 = vadd.f32 0.0, %v1766
      %v1768 = vpop.f32.mrb[0].mxu0
      %1769 = vmatprep.mubr.f32.mxu0 0.0
      %1770 = vmatmul.mubr.f32.gmra.mrb[0].mxu0 %v1625
      %v1771 = vpop.f32.mrb[0].mxu0
      %v1772 = vadd.f32 0.0, %v1771
      %v1773 = vpop.f32.mrb[0].mxu0
      %1774 = vdwg.mxu0
      %v1775 = vadd.f32 %v1544, %v1697
      %v1776 = vadd.f32 %v1545, %v1702
      %v1777 = vadd.f32 %v1546, %v1707
      %v1778 = vadd.f32 %v1547, %v1712
      %v1779 = vadd.f32 %v1548, %v1717
      %v1780 = vadd.f32 %v1549, %v1722
      %v1781 = vadd.f32 %v1550, %v1727
      %v1782 = vadd.f32 %v1551, %v1732
      %v1783 = vadd.f32 %v1552, %v1737
      %v1784 = vadd.f32 %v1553, %v1742
      %v1785 = vadd.f32 %v1554, %v1747
      %v1786 = vadd.f32 %v1555, %v1752
      %v1787 = vadd.f32 %v1556, %v1757
      %v1788 = vadd.f32 %v1557, %v1762
      %v1789 = vadd.f32 %v1558, %v1767
      %v1790 = vadd.f32 %v1559, %v1772
      %v1791 = vld [vmem:[%s1560 + $0x1] sm:$0xff]
      %v1792 = vld [vmem:[%s1560 + $0x9] sm:$0xff]
      %v1793 = vld [vmem:[%s1560 + $0x19] sm:$0xff]
      %v1794 = vld [vmem:[%s1560 + $0x21] sm:$0xff]
      %v1795 = vld [vmem:[%s1560 + $0x31] sm:$0xff]
      %v1796 = vld [vmem:[%s1560 + $0x39] sm:$0xff]
      %v1797 = vld [vmem:[%s1560 + $0x49] sm:$0xff]
      %v1798 = vld [vmem:[%s1560 + $0x51] sm:$0xff]
      %v1799 = vld [vmem:[%s1560 + $0x61] sm:$0xff]
      %v1800 = vld [vmem:[%s1560 + $0x69] sm:$0xff]
      %v1801 = vld [vmem:[%s1560 + $0x79] sm:$0xff]
      %v1802 = vld [vmem:[%s1560 + $0x81] sm:$0xff]
      %v1803 = vld [vmem:[%s1560 + $0x91] sm:$0xff]
      %v1804 = vld [vmem:[%s1560 + $0x99] sm:$0xff]
      %v1805 = vld [vmem:[%s1560 + $0xa9] sm:$0xff]
      %v1806 = vld [vmem:[%s1560 + $0xb1] sm:$0xff]
      %s1807 = scalar_lea.vmem %s1, 28
      %v1808 = vld [vmem:[%s1807] sm:$0xf]
      %v1810 = vsel %vm245, %v1791, 0
      %v1813 = vsel %vm245, %v1792, 0
      %v1816 = vsel %vm245, %v1793, 0
      %v1819 = vsel %vm245, %v1794, 0
      %v1822 = vsel %vm245, %v1795, 0
      %v1825 = vsel %vm245, %v1796, 0
      %v1828 = vsel %vm245, %v1797, 0
      %v1831 = vsel %vm245, %v1798, 0
      %v1834 = vsel %vm245, %v1799, 0
      %v1837 = vsel %vm245, %v1800, 0
      %v1840 = vsel %vm245, %v1801, 0
      %v1843 = vsel %vm245, %v1802, 0
      %v1846 = vsel %vm245, %v1803, 0
      %v1849 = vsel %vm245, %v1804, 0
      %v1852 = vsel %vm245, %v1805, 0
      %v1855 = vsel %vm245, %v1806, 0
      %v1858 = vsel %vm294, %v1808, 0
      %1860 = vmatprep.subr.mxu0 0.0
      %1861 = vmatpush1.msra.mxu0 %v1858
      %1862 = vmatprep.subr.mxu0 0.0
      %1863 = vmatpush1.msra.mxu0 0.0
      %1864 = vmatprep.subr.mxu0 0.0
      %1865 = vmatpush1.msra.mxu0 0.0
      %1866 = vmatprep.subr.mxu0 0.0
      %1867 = vmatpush1.msra.mxu0 0.0
      %1868 = vmatprep.subr.mxu0 0.0
      %1869 = vmatpush1.msra.mxu0 0.0
      %1870 = vmatprep.subr.mxu0 0.0
      %1871 = vmatpush1.msra.mxu0 0.0
      %1872 = vmatprep.subr.mxu0 0.0
      %1873 = vmatpush1.msra.mxu0 0.0
      %1874 = vmatprep.subr.mxu0 0.0
      %1875 = vmatpush1.msra.mxu0 0.0
      %1876 = vmatprep.subr.mxu0 0.0
      %1877 = vmatpush1.msra.mxu0 0.0
      %1878 = vmatprep.subr.mxu0 0.0
      %1879 = vmatpush1.msra.mxu0 0.0
      %1880 = vmatprep.subr.mxu0 0.0
      %1881 = vmatpush1.msra.mxu0 0.0
      %1882 = vmatprep.subr.mxu0 0.0
      %1883 = vmatpush1.msra.mxu0 0.0
      %1884 = vmatprep.subr.mxu0 0.0
      %1885 = vmatpush1.msra.mxu0 0.0
      %1886 = vmatprep.subr.mxu0 0.0
      %1887 = vmatpush1.msra.mxu0 0.0
      %1888 = vmatprep.subr.mxu0 0.0
      %1889 = vmatpush1.msra.mxu0 0.0
      %1890 = vmatprep.subr.mxu0 0.0
      %1891 = vmatpush1.msra.mxu0 0.0
      %1892 = vmatprep.subr.mxu0 0.0
      %1893 = vmatpush1.msra.mxu0 0.0
      %1894 = vmatprep.subr.mxu0 0.0
      %1895 = vmatpush1.msra.mxu0 0.0
      %1896 = vmatprep.subr.mxu0 0.0
      %1897 = vmatpush1.msra.mxu0 0.0
      %1898 = vmatprep.subr.mxu0 0.0
      %1899 = vmatpush1.msra.mxu0 0.0
      %1900 = vmatprep.subr.mxu0 0.0
      %1901 = vmatpush1.msra.mxu0 0.0
      %1902 = vmatprep.subr.mxu0 0.0
      %1903 = vmatpush1.msra.mxu0 0.0
      %1904 = vmatprep.subr.mxu0 0.0
      %1905 = vmatpush1.msra.mxu0 0.0
      %1906 = vmatprep.subr.mxu0 0.0
      %1907 = vmatpush1.msra.mxu0 0.0
      %1908 = vmatprep.subr.mxu0 0.0
      %1909 = vmatpush1.msra.mxu0 0.0
      %1910 = vmatprep.subr.mxu0 0.0
      %1911 = vmatpush1.msra.mxu0 0.0
      %1912 = vmatprep.subr.mxu0 0.0
      %1913 = vmatpush1.msra.mxu0 0.0
      %1914 = vmatprep.subr.mxu0 0.0
      %1915 = vmatpush1.msra.mxu0 0.0
      %1916 = vmatprep.subr.mxu0 0.0
      %1917 = vmatpush1.msra.mxu0 0.0
      %1918 = vmatprep.subr.mxu0 0.0
      %1919 = vmatpush1.msra.mxu0 0.0
      %1920 = vmatprep.subr.mxu0 0.0
      %1921 = vmatpush1.msra.mxu0 0.0
      %1922 = vmatprep.subr.mxu0 0.0
      %1923 = vmatpush1.msra.mxu0 0.0
      %1924 = vmatprep.mubr.f32.mxu0 0.0
      %1925 = vmatmul.mubr.f32.gmra.mrb[0].mxu0 %v1810
      %v1926 = vpop.f32.mrb[0].mxu0
      %v1927 = vadd.f32 0.0, %v1926
      %v1928 = vpop.f32.mrb[0].mxu0
      %1929 = vmatprep.mubr.f32.mxu0 0.0
      %1930 = vmatmul.mubr.f32.gmra.mrb[0].mxu0 %v1813
      %v1931 = vpop.f32.mrb[0].mxu0
      %v1932 = vadd.f32 0.0, %v1931
      %v1933 = vpop.f32.mrb[0].mxu0
      %1934 = vmatprep.mubr.f32.mxu0 0.0
      %1935 = vmatmul.mubr.f32.gmra.mrb[0].mxu0 %v1816
      %v1936 = vpop.f32.mrb[0].mxu0
      %v1937 = vadd.f32 0.0, %v1936
      %v1938 = vpop.f32.mrb[0].mxu0
      %1939 = vmatprep.mubr.f32.mxu0 0.0
      %1940 = vmatmul.mubr.f32.gmra.mrb[0].mxu0 %v1819
      %v1941 = vpop.f32.mrb[0].mxu0
      %v1942 = vadd.f32 0.0, %v1941
      %v1943 = vpop.f32.mrb[0].mxu0
      %1944 = vmatprep.mubr.f32.mxu0 0.0
      %1945 = vmatmul.mubr.f32.gmra.mrb[0].mxu0 %v1822
      %v1946 = vpop.f32.mrb[0].mxu0
      %v1947 = vadd.f32 0.0, %v1946
      %v1948 = vpop.f32.mrb[0].mxu0
      %1949 = vmatprep.mubr.f32.mxu0 0.0
      %1950 = vmatmul.mubr.f32.gmra.mrb[0].mxu0 %v1825
      %v1951 = vpop.f32.mrb[0].mxu0
      %v1952 = vadd.f32 0.0, %v1951
      %v1953 = vpop.f32.mrb[0].mxu0
      %1954 = vmatprep.mubr.f32.mxu0 0.0
      %1955 = vmatmul.mubr.f32.gmra.mrb[0].mxu0 %v1828
      %v1956 = vpop.f32.mrb[0].mxu0
      %v1957 = vadd.f32 0.0, %v1956
      %v1958 = vpop.f32.mrb[0].mxu0
      %1959 = vmatprep.mubr.f32.mxu0 0.0
      %1960 = vmatmul.mubr.f32.gmra.mrb[0].mxu0 %v1831
      %v1961 = vpop.f32.mrb[0].mxu0
      %v1962 = vadd.f32 0.0, %v1961
      %v1963 = vpop.f32.mrb[0].mxu0
      %1964 = vmatprep.mubr.f32.mxu0 0.0
      %1965 = vmatmul.mubr.f32.gmra.mrb[0].mxu0 %v1834
      %v1966 = vpop.f32.mrb[0].mxu0
      %v1967 = vadd.f32 0.0, %v1966
      %v1968 = vpop.f32.mrb[0].mxu0
      %1969 = vmatprep.mubr.f32.mxu0 0.0
      %1970 = vmatmul.mubr.f32.gmra.mrb[0].mxu0 %v1837
      %v1971 = vpop.f32.mrb[0].mxu0
      %v1972 = vadd.f32 0.0, %v1971
      %v1973 = vpop.f32.mrb[0].mxu0
      %1974 = vmatprep.mubr.f32.mxu0 0.0
      %1975 = vmatmul.mubr.f32.gmra.mrb[0].mxu0 %v1840
      %v1976 = vpop.f32.mrb[0].mxu0
      %v1977 = vadd.f32 0.0, %v1976
      %v1978 = vpop.f32.mrb[0].mxu0
      %1979 = vmatprep.mubr.f32.mxu0 0.0
      %1980 = vmatmul.mubr.f32.gmra.mrb[0].mxu0 %v1843
      %v1981 = vpop.f32.mrb[0].mxu0
      %v1982 = vadd.f32 0.0, %v1981
      %v1983 = vpop.f32.mrb[0].mxu0
      %1984 = vmatprep.mubr.f32.mxu0 0.0
      %1985 = vmatmul.mubr.f32.gmra.mrb[0].mxu0 %v1846
      %v1986 = vpop.f32.mrb[0].mxu0
      %v1987 = vadd.f32 0.0, %v1986
      %v1988 = vpop.f32.mrb[0].mxu0
      %1989 = vmatprep.mubr.f32.mxu0 0.0
      %1990 = vmatmul.mubr.f32.gmra.mrb[0].mxu0 %v1849
      %v1991 = vpop.f32.mrb[0].mxu0
      %v1992 = vadd.f32 0.0, %v1991
      %v1993 = vpop.f32.mrb[0].mxu0
      %1994 = vmatprep.mubr.f32.mxu0 0.0
      %1995 = vmatmul.mubr.f32.gmra.mrb[0].mxu0 %v1852
      %v1996 = vpop.f32.mrb[0].mxu0
      %v1997 = vadd.f32 0.0, %v1996
      %v1998 = vpop.f32.mrb[0].mxu0
      %1999 = vmatprep.mubr.f32.mxu0 0.0
      %2000 = vmatmul.mubr.f32.gmra.mrb[0].mxu0 %v1855
      %v2001 = vpop.f32.mrb[0].mxu0
      %v2002 = vadd.f32 0.0, %v2001
      %v2003 = vpop.f32.mrb[0].mxu0
      %2004 = vdwg.mxu0
      %v2005 = vadd.f32 %v1775, %v1927
      %v2006 = vadd.f32 %v1776, %v1932
      %v2007 = vadd.f32 %v1777, %v1937
      %v2008 = vadd.f32 %v1778, %v1942
      %v2009 = vadd.f32 %v1779, %v1947
      %v2010 = vadd.f32 %v1780, %v1952
      %v2011 = vadd.f32 %v1781, %v1957
      %v2012 = vadd.f32 %v1782, %v1962
      %v2013 = vadd.f32 %v1783, %v1967
      %v2014 = vadd.f32 %v1784, %v1972
      %v2015 = vadd.f32 %v1785, %v1977
      %v2016 = vadd.f32 %v1786, %v1982
      %v2017 = vadd.f32 %v1787, %v1987
      %v2018 = vadd.f32 %v1788, %v1992
      %v2019 = vadd.f32 %v1789, %v1997
      %v2020 = vadd.f32 %v1790, %v2002
      %v2021 = vld [vmem:[%s1560 + $0x2] sm:$0xff]
      %v2022 = vld [vmem:[%s1560 + $0xa] sm:$0xff]
      %v2023 = vld [vmem:[%s1560 + $0x1a] sm:$0xff]
      %v2024 = vld [vmem:[%s1560 + $0x22] sm:$0xff]
      %v2025 = vld [vmem:[%s1560 + $0x32] sm:$0xff]
      %v2026 = vld [vmem:[%s1560 + $0x3a] sm:$0xff]
      %v2027 = vld [vmem:[%s1560 + $0x4a] sm:$0xff]
      %v2028 = vld [vmem:[%s1560 + $0x52] sm:$0xff]
      %v2029 = vld [vmem:[%s1560 + $0x62] sm:$0xff]
      %v2030 = vld [vmem:[%s1560 + $0x6a] sm:$0xff]
      %v2031 = vld [vmem:[%s1560 + $0x7a] sm:$0xff]
      %v2032 = vld [vmem:[%s1560 + $0x82] sm:$0xff]
      %v2033 = vld [vmem:[%s1560 + $0x92] sm:$0xff]
      %v2034 = vld [vmem:[%s1560 + $0x9a] sm:$0xff]
      %v2035 = vld [vmem:[%s1560 + $0xaa] sm:$0xff]
      %v2036 = vld [vmem:[%s1560 + $0xb2] sm:$0xff]
      %s2037 = scalar_lea.vmem %s1, 32
      %v2038 = vld [vmem:[%s2037] sm:$0xf]
      %v2040 = vsel %vm245, %v2021, 0
      %v2043 = vsel %vm245, %v2022, 0
      %v2046 = vsel %vm245, %v2023, 0
      %v2049 = vsel %vm245, %v2024, 0
      %v2052 = vsel %vm245, %v2025, 0
      %v2055 = vsel %vm245, %v2026, 0
      %v2058 = vsel %vm245, %v2027, 0
      %v2061 = vsel %vm245, %v2028, 0
      %v2064 = vsel %vm245, %v2029, 0
      %v2067 = vsel %vm245, %v2030, 0
      %v2070 = vsel %vm245, %v2031, 0
      %v2073 = vsel %vm245, %v2032, 0
      %v2076 = vsel %vm245, %v2033, 0
      %v2079 = vsel %vm245, %v2034, 0
      %v2082 = vsel %vm245, %v2035, 0
      %v2085 = vsel %vm245, %v2036, 0
      %v2088 = vsel %vm294, %v2038, 0
      %2090 = vmatprep.subr.mxu0 0.0
      %2091 = vmatpush1.msra.mxu0 %v2088
      %2092 = vmatprep.subr.mxu0 0.0
      %2093 = vmatpush1.msra.mxu0 0.0
      %2094 = vmatprep.subr.mxu0 0.0
      %2095 = vmatpush1.msra.mxu0 0.0
      %2096 = vmatprep.subr.mxu0 0.0
      %2097 = vmatpush1.msra.mxu0 0.0
      %2098 = vmatprep.subr.mxu0 0.0
      %2099 = vmatpush1.msra.mxu0 0.0
      %2100 = vmatprep.subr.mxu0 0.0
      %2101 = vmatpush1.msra.mxu0 0.0
      %2102 = vmatprep.subr.mxu0 0.0
      %2103 = vmatpush1.msra.mxu0 0.0
      %2104 = vmatprep.subr.mxu0 0.0
      %2105 = vmatpush1.msra.mxu0 0.0
      %2106 = vmatprep.subr.mxu0 0.0
      %2107 = vmatpush1.msra.mxu0 0.0
      %2108 = vmatprep.subr.mxu0 0.0
      %2109 = vmatpush1.msra.mxu0 0.0
      %2110 = vmatprep.subr.mxu0 0.0
      %2111 = vmatpush1.msra.mxu0 0.0
      %2112 = vmatprep.subr.mxu0 0.0
      %2113 = vmatpush1.msra.mxu0 0.0
      %2114 = vmatprep.subr.mxu0 0.0
      %2115 = vmatpush1.msra.mxu0 0.0
      %2116 = vmatprep.subr.mxu0 0.0
      %2117 = vmatpush1.msra.mxu0 0.0
      %2118 = vmatprep.subr.mxu0 0.0
      %2119 = vmatpush1.msra.mxu0 0.0
      %2120 = vmatprep.subr.mxu0 0.0
      %2121 = vmatpush1.msra.mxu0 0.0
      %2122 = vmatprep.subr.mxu0 0.0
      %2123 = vmatpush1.msra.mxu0 0.0
      %2124 = vmatprep.subr.mxu0 0.0
      %2125 = vmatpush1.msra.mxu0 0.0
      %2126 = vmatprep.subr.mxu0 0.0
      %2127 = vmatpush1.msra.mxu0 0.0
      %2128 = vmatprep.subr.mxu0 0.0
      %2129 = vmatpush1.msra.mxu0 0.0
      %2130 = vmatprep.subr.mxu0 0.0
      %2131 = vmatpush1.msra.mxu0 0.0
      %2132 = vmatprep.subr.mxu0 0.0
      %2133 = vmatpush1.msra.mxu0 0.0
      %2134 = vmatprep.subr.mxu0 0.0
      %2135 = vmatpush1.msra.mxu0 0.0
      %2136 = vmatprep.subr.mxu0 0.0
      %2137 = vmatpush1.msra.mxu0 0.0
      %2138 = vmatprep.subr.mxu0 0.0
      %2139 = vmatpush1.msra.mxu0 0.0
      %2140 = vmatprep.subr.mxu0 0.0
      %2141 = vmatpush1.msra.mxu0 0.0
      %2142 = vmatprep.subr.mxu0 0.0
      %2143 = vmatpush1.msra.mxu0 0.0
      %2144 = vmatprep.subr.mxu0 0.0
      %2145 = vmatpush1.msra.mxu0 0.0
      %2146 = vmatprep.subr.mxu0 0.0
      %2147 = vmatpush1.msra.mxu0 0.0
      %2148 = vmatprep.subr.mxu0 0.0
      %2149 = vmatpush1.msra.mxu0 0.0
      %2150 = vmatprep.subr.mxu0 0.0
      %2151 = vmatpush1.msra.mxu0 0.0
      %2152 = vmatprep.subr.mxu0 0.0
      %2153 = vmatpush1.msra.mxu0 0.0
      %2154 = vmatprep.mubr.f32.mxu0 0.0
      %2155 = vmatmul.mubr.f32.gmra.mrb[0].mxu0 %v2040
      %v2156 = vpop.f32.mrb[0].mxu0
      %v2157 = vadd.f32 0.0, %v2156
      %v2158 = vpop.f32.mrb[0].mxu0
      %2159 = vmatprep.mubr.f32.mxu0 0.0
      %2160 = vmatmul.mubr.f32.gmra.mrb[0].mxu0 %v2043
      %v2161 = vpop.f32.mrb[0].mxu0
      %v2162 = vadd.f32 0.0, %v2161
      %v2163 = vpop.f32.mrb[0].mxu0
      %2164 = vmatprep.mubr.f32.mxu0 0.0
      %2165 = vmatmul.mubr.f32.gmra.mrb[0].mxu0 %v2046
      %v2166 = vpop.f32.mrb[0].mxu0
      %v2167 = vadd.f32 0.0, %v2166
      %v2168 = vpop.f32.mrb[0].mxu0
      %2169 = vmatprep.mubr.f32.mxu0 0.0
      %2170 = vmatmul.mubr.f32.gmra.mrb[0].mxu0 %v2049
      %v2171 = vpop.f32.mrb[0].mxu0
      %v2172 = vadd.f32 0.0, %v2171
      %v2173 = vpop.f32.mrb[0].mxu0
      %2174 = vmatprep.mubr.f32.mxu0 0.0
      %2175 = vmatmul.mubr.f32.gmra.mrb[0].mxu0 %v2052
      %v2176 = vpop.f32.mrb[0].mxu0
      %v2177 = vadd.f32 0.0, %v2176
      %v2178 = vpop.f32.mrb[0].mxu0
      %2179 = vmatprep.mubr.f32.mxu0 0.0
      %2180 = vmatmul.mubr.f32.gmra.mrb[0].mxu0 %v2055
      %v2181 = vpop.f32.mrb[0].mxu0
      %v2182 = vadd.f32 0.0, %v2181
      %v2183 = vpop.f32.mrb[0].mxu0
      %2184 = vmatprep.mubr.f32.mxu0 0.0
      %2185 = vmatmul.mubr.f32.gmra.mrb[0].mxu0 %v2058
      %v2186 = vpop.f32.mrb[0].mxu0
      %v2187 = vadd.f32 0.0, %v2186
      %v2188 = vpop.f32.mrb[0].mxu0
      %2189 = vmatprep.mubr.f32.mxu0 0.0
      %2190 = vmatmul.mubr.f32.gmra.mrb[0].mxu0 %v2061
      %v2191 = vpop.f32.mrb[0].mxu0
      %v2192 = vadd.f32 0.0, %v2191
      %v2193 = vpop.f32.mrb[0].mxu0
      %2194 = vmatprep.mubr.f32.mxu0 0.0
      %2195 = vmatmul.mubr.f32.gmra.mrb[0].mxu0 %v2064
      %v2196 = vpop.f32.mrb[0].mxu0
      %v2197 = vadd.f32 0.0, %v2196
      %v2198 = vpop.f32.mrb[0].mxu0
      %2199 = vmatprep.mubr.f32.mxu0 0.0
      %2200 = vmatmul.mubr.f32.gmra.mrb[0].mxu0 %v2067
      %v2201 = vpop.f32.mrb[0].mxu0
      %v2202 = vadd.f32 0.0, %v2201
      %v2203 = vpop.f32.mrb[0].mxu0
      %2204 = vmatprep.mubr.f32.mxu0 0.0
      %2205 = vmatmul.mubr.f32.gmra.mrb[0].mxu0 %v2070
      %v2206 = vpop.f32.mrb[0].mxu0
      %v2207 = vadd.f32 0.0, %v2206
      %v2208 = vpop.f32.mrb[0].mxu0
      %2209 = vmatprep.mubr.f32.mxu0 0.0
      %2210 = vmatmul.mubr.f32.gmra.mrb[0].mxu0 %v2073
      %v2211 = vpop.f32.mrb[0].mxu0
      %v2212 = vadd.f32 0.0, %v2211
      %v2213 = vpop.f32.mrb[0].mxu0
      %2214 = vmatprep.mubr.f32.mxu0 0.0
      %2215 = vmatmul.mubr.f32.gmra.mrb[0].mxu0 %v2076
      %v2216 = vpop.f32.mrb[0].mxu0
      %v2217 = vadd.f32 0.0, %v2216
      %v2218 = vpop.f32.mrb[0].mxu0
      %2219 = vmatprep.mubr.f32.mxu0 0.0
      %2220 = vmatmul.mubr.f32.gmra.mrb[0].mxu0 %v2079
      %v2221 = vpop.f32.mrb[0].mxu0
      %v2222 = vadd.f32 0.0, %v2221
      %v2223 = vpop.f32.mrb[0].mxu0
      %2224 = vmatprep.mubr.f32.mxu0 0.0
      %2225 = vmatmul.mubr.f32.gmra.mrb[0].mxu0 %v2082
      %v2226 = vpop.f32.mrb[0].mxu0
      %v2227 = vadd.f32 0.0, %v2226
      %v2228 = vpop.f32.mrb[0].mxu0
      %2229 = vmatprep.mubr.f32.mxu0 0.0
      %2230 = vmatmul.mubr.f32.gmra.mrb[0].mxu0 %v2085
      %v2231 = vpop.f32.mrb[0].mxu0
      %v2232 = vadd.f32 0.0, %v2231
      %v2233 = vpop.f32.mrb[0].mxu0
      %2234 = vdwg.mxu0
      %v2235 = vadd.f32 %v2005, %v2157
      %v2236 = vadd.f32 %v2006, %v2162
      %v2237 = vadd.f32 %v2007, %v2167
      %v2238 = vadd.f32 %v2008, %v2172
      %v2239 = vadd.f32 %v2009, %v2177
      %v2240 = vadd.f32 %v2010, %v2182
      %v2241 = vadd.f32 %v2011, %v2187
      %v2242 = vadd.f32 %v2012, %v2192
      %v2243 = vadd.f32 %v2013, %v2197
      %v2244 = vadd.f32 %v2014, %v2202
      %v2245 = vadd.f32 %v2015, %v2207
      %v2246 = vadd.f32 %v2016, %v2212
      %v2247 = vadd.f32 %v2017, %v2217
      %v2248 = vadd.f32 %v2018, %v2222
      %v2249 = vadd.f32 %v2019, %v2227
      %v2250 = vadd.f32 %v2020, %v2232
      %v2251 = vld [vmem:[%s2] sm:$0x1]
      %v2253 = vlaneseq
      %v2254 = vshrl.u32 %v2253, 7
      %v2255 = vsub.s32 0, %v2254
      %v2256 = vrot.slane %v2251, %v2255
      %v2258 = vadd.f32 %v2235, %v2256
      %v2259 = vadd.f32 %v2236, %v2256
      %v2260 = vadd.f32 %v2237, %v2256
      %v2261 = vadd.f32 %v2238, %v2256
      %v2262 = vadd.f32 %v2239, %v2256
      %v2263 = vadd.f32 %v2240, %v2256
      %v2264 = vadd.f32 %v2241, %v2256
      %v2265 = vadd.f32 %v2242, %v2256
      %v2266 = vadd.f32 %v2243, %v2256
      %v2267 = vadd.f32 %v2244, %v2256
      %v2268 = vadd.f32 %v2245, %v2256
      %v2269 = vadd.f32 %v2246, %v2256
      %v2270 = vadd.f32 %v2247, %v2256
      %v2271 = vadd.f32 %v2248, %v2256
      %v2272 = vadd.f32 %v2249, %v2256
      %v2273 = vadd.f32 %v2250, %v2256
      %v2274 = vxor.u32 %v2258, 2147483648
      %v2275 = vxor.u32 %v2259, 2147483648
      %v2276 = vxor.u32 %v2260, 2147483648
      %v2277 = vxor.u32 %v2261, 2147483648
      %v2278 = vxor.u32 %v2262, 2147483648
      %v2279 = vxor.u32 %v2263, 2147483648
      %v2280 = vxor.u32 %v2264, 2147483648
      %v2281 = vxor.u32 %v2265, 2147483648
      %v2282 = vxor.u32 %v2266, 2147483648
      %v2283 = vxor.u32 %v2267, 2147483648
      %v2284 = vxor.u32 %v2268, 2147483648
      %v2285 = vxor.u32 %v2269, 2147483648
      %v2286 = vxor.u32 %v2270, 2147483648
      %v2287 = vxor.u32 %v2271, 2147483648
      %v2288 = vxor.u32 %v2272, 2147483648
      %v2289 = vxor.u32 %v2273, 2147483648
      %v2290 = vmul.f32 %v2274, 1.442695
      %v2291 = vpow.pop %v2290
      %v2292 = vmul.f32 %v2275, 1.442695
      %v2293 = vpow.pop %v2292
      %v2294 = vmul.f32 %v2276, 1.442695
      %v2295 = vpow.pop %v2294
      %v2296 = vmul.f32 %v2277, 1.442695
      %v2297 = vpow.pop %v2296
      %v2298 = vmul.f32 %v2278, 1.442695
      %v2299 = vpow.pop %v2298
      %v2300 = vmul.f32 %v2279, 1.442695
      %v2301 = vpow.pop %v2300
      %v2302 = vmul.f32 %v2280, 1.442695
      %v2303 = vpow.pop %v2302
      %v2304 = vmul.f32 %v2281, 1.442695
      %v2305 = vpow.pop %v2304
      %v2306 = vmul.f32 %v2282, 1.442695
      %v2307 = vpow.pop %v2306
      %v2308 = vmul.f32 %v2283, 1.442695
      %v2309 = vpow.pop %v2308
      %v2310 = vmul.f32 %v2284, 1.442695
      %v2311 = vpow.pop %v2310
      %v2312 = vmul.f32 %v2285, 1.442695
      %v2313 = vpow.pop %v2312
      %v2314 = vmul.f32 %v2286, 1.442695
      %v2315 = vpow.pop %v2314
      %v2316 = vmul.f32 %v2287, 1.442695
      %v2317 = vpow.pop %v2316
      %v2318 = vmul.f32 %v2288, 1.442695
      %v2319 = vpow.pop %v2318
      %v2320 = vmul.f32 %v2289, 1.442695
      %v2321 = vpow.pop %v2320
      %v2322 = vadd.f32 %v2291, 1.0
      %v2323 = vadd.f32 %v2293, 1.0
      %v2324 = vadd.f32 %v2295, 1.0
      %v2325 = vadd.f32 %v2297, 1.0
      %v2326 = vadd.f32 %v2299, 1.0
      %v2327 = vadd.f32 %v2301, 1.0
      %v2328 = vadd.f32 %v2303, 1.0
      %v2329 = vadd.f32 %v2305, 1.0
      %v2330 = vadd.f32 %v2307, 1.0
      %v2331 = vadd.f32 %v2309, 1.0
      %v2332 = vadd.f32 %v2311, 1.0
      %v2333 = vadd.f32 %v2313, 1.0
      %v2334 = vadd.f32 %v2315, 1.0
      %v2335 = vadd.f32 %v2317, 1.0
      %v2336 = vadd.f32 %v2319, 1.0
      %v2337 = vadd.f32 %v2321, 1.0
      %v2338 = vrcp.pop %v2322
      %v2339 = vmul.f32 1.0, %v2338
      %v2340 = vrcp.pop %v2323
      %v2341 = vmul.f32 1.0, %v2340
      %v2342 = vrcp.pop %v2324
      %v2343 = vmul.f32 1.0, %v2342
      %v2344 = vrcp.pop %v2325
      %v2345 = vmul.f32 1.0, %v2344
      %v2346 = vrcp.pop %v2326
      %v2347 = vmul.f32 1.0, %v2346
      %v2348 = vrcp.pop %v2327
      %v2349 = vmul.f32 1.0, %v2348
      %v2350 = vrcp.pop %v2328
      %v2351 = vmul.f32 1.0, %v2350
      %v2352 = vrcp.pop %v2329
      %v2353 = vmul.f32 1.0, %v2352
      %v2354 = vrcp.pop %v2330
      %v2355 = vmul.f32 1.0, %v2354
      %v2356 = vrcp.pop %v2331
      %v2357 = vmul.f32 1.0, %v2356
      %v2358 = vrcp.pop %v2332
      %v2359 = vmul.f32 1.0, %v2358
      %v2360 = vrcp.pop %v2333
      %v2361 = vmul.f32 1.0, %v2360
      %v2362 = vrcp.pop %v2334
      %v2363 = vmul.f32 1.0, %v2362
      %v2364 = vrcp.pop %v2335
      %v2365 = vmul.f32 1.0, %v2364
      %v2366 = vrcp.pop %v2336
      %v2367 = vmul.f32 1.0, %v2366
      %v2368 = vrcp.pop %v2337
      %v2369 = vmul.f32 1.0, %v2368
      %v2370 = vmul.f32 %v2258, %v2339
      %v2371 = vmul.f32 %v2259, %v2341
      %v2372 = vmul.f32 %v2260, %v2343
      %v2373 = vmul.f32 %v2261, %v2345
      %v2374 = vmul.f32 %v2262, %v2347
      %v2375 = vmul.f32 %v2263, %v2349
      %v2376 = vmul.f32 %v2264, %v2351
      %v2377 = vmul.f32 %v2265, %v2353
      %v2378 = vmul.f32 %v2266, %v2355
      %v2379 = vmul.f32 %v2267, %v2357
      %v2380 = vmul.f32 %v2268, %v2359
      %v2381 = vmul.f32 %v2269, %v2361
      %v2382 = vmul.f32 %v2270, %v2363
      %v2383 = vmul.f32 %v2271, %v2365
      %v2384 = vmul.f32 %v2272, %v2367
      %v2385 = vmul.f32 %v2273, %v2369
      %vm2386 = vcmask 64512
      %2387 = vst.msk [vmem:[%s208] sm:$0xff] %vm2386, %v2370
      %2388 = vst.msk [vmem:[%s208 + $0x8] sm:$0xff] %vm2386, %v2371
      %2389 = vst.msk [vmem:[%s208 + $0x10] sm:$0xff] %vm2386, %v2372
      %2390 = vst.msk [vmem:[%s208 + $0x18] sm:$0xff] %vm2386, %v2373
      %2391 = vst.msk [vmem:[%s208 + $0x20] sm:$0xff] %vm2386, %v2374
      %2392 = vst.msk [vmem:[%s208 + $0x28] sm:$0xff] %vm2386, %v2375
      %2393 = vst.msk [vmem:[%s208 + $0x30] sm:$0xff] %vm2386, %v2376
      %2394 = vst.msk [vmem:[%s208 + $0x38] sm:$0xff] %vm2386, %v2377
      %2395 = vst.msk [vmem:[%s208 + $0x40] sm:$0xff] %vm2386, %v2378
      %2396 = vst.msk [vmem:[%s208 + $0x48] sm:$0xff] %vm2386, %v2379
      %2397 = vst.msk [vmem:[%s208 + $0x50] sm:$0xff] %vm2386, %v2380
      %2398 = vst.msk [vmem:[%s208 + $0x58] sm:$0xff] %vm2386, %v2381
      %2399 = vst.msk [vmem:[%s208 + $0x60] sm:$0xff] %vm2386, %v2382
      %2400 = vst.msk [vmem:[%s208 + $0x68] sm:$0xff] %vm2386, %v2383
      %2401 = vst.msk [vmem:[%s208 + $0x70] sm:$0xff] %vm2386, %v2384
      %2402 = vst.msk [vmem:[%s208 + $0x78] sm:$0xff] %vm2386, %v2385
      %s2403 = smul.u32 8, %s19
      %p2404 = scmp.lt.s32.totalorder %s18, 1
      %s2405 = scalar_select %p2404, %s18, 1
      %p2406 = scmp.lt.s32.totalorder %s2403, 15
      %s2407 = scalar_select %p2406, %s2403, 15
      %s2408 = smul.addr %s2407, 2
      %s2409 = smul.addr %s2405, 32
      %s2410 = sadd.s32 %s2408, %s2409
      %s2411 = smul.addr %s2410, 8
      %s2412 = scalar_lea.vmem %s3, %s2411
      // Predicated region
      $region33: #{tpu_custom_call.1} parent=31 // pred_check
        %p2413 = pneg %p118
      $region34: #{tpu_custom_call.1} parent=31 // pred_check_branch
        %2415 = sbr.rel (%p2413) target = $region36
      $region35: #{tpu_custom_call.1} parent=31 // pred_region
        %s2416 = smul.u32 8, %s19
      $region36: #{tpu_custom_call.1} parent=31 // pred_fallthru
        _
    $region32: #{tpu_custom_call.1} parent=5 // pred_fallthru
      _
    %p2417 = scmp.le.s32.totalorder 2, %s9
    // Predicated region
    $region37: #{tpu_custom_call.1} parent=5 // pred_check
      %p2418 = pneg %p2417
    $region38: #{tpu_custom_call.1} parent=5 // pred_check_branch
      %2420 = sbr.rel (%p2418) target = $region40
    $region39: #{tpu_custom_call.1} parent=5 // pred_region
      %s2421 = ssub.s32 %s9, 2
      // Predicated region
      $region41: #{tpu_custom_call.1} parent=39 // pred_check
        %p2422 = pneg %p124
      $region42: #{tpu_custom_call.1} parent=39 // pred_check_branch
        %2424 = sbr.rel (%p2422) target = $region44
      $region43: #{tpu_custom_call.1} parent=39 // pred_region
        %s2425 = smul.u32 8, %s21
        %p2426 = scmp.lt.s32.totalorder %s20, 1
        %s2427 = scalar_select %p2426, %s20, 1
        %p2428 = scmp.lt.s32.totalorder %s2425, 15
        %s2429 = scalar_select %p2428, %s2425, 15
        %s2430 = smul.addr %s2429, 2
        %s2431 = smul.addr %s2427, 32
        %s2432 = sadd.s32 %s2430, %s2431
        %s2433 = smul.addr %s2432, 8
        %s2434 = scalar_lea.vmem %s3, %s2433
      $region44: #{tpu_custom_call.1} parent=39 // pred_fallthru
        _
    $region40: #{tpu_custom_call.1} parent=5 // pred_fallthru
      _
  $region6: #{tpu_custom_call.1} parent=0 // loop_footer
    %s13 = sadd.s32 1, %s9
  $region7: #{tpu_custom_call.1} parent=0 // loop_footer_branch
    %8 = sbr.rel target = $region3
  $region8: #{tpu_custom_call.1} parent=0 // loop_exit
    _

</llo_original>
